<compile_context>
chip_gen: v6e
topology: v6e:2x2x1
jax: 0.10.0
libtpu: 0.0.40
codegen_flags: <defaults>
</compile_context>

<pallas_src>
import functools
import math

import jax
import jax.numpy as jnp
import numpy as np
from jax import lax
from jax.experimental import pallas as pl
from jax.experimental.pallas import tpu as pltpu


# ---------------------------------------------------------------------------
# Kernel 1: fused RoPE + per-(batch, head) attention, tiled over query rows.
# ---------------------------------------------------------------------------
def _make_attn_kernel(*, seq_len, q_tile, head_dim, mask_mode, mask_value,
                      compute_dtype, approx_recip, use_roll):
    S, TQ, D = seq_len, q_tile, head_dim
    half = D // 2
    inv_scale = 1.0 / math.sqrt(D)
    neg_min = float(jnp.finfo(jnp.float32).min)
    cdt = compute_dtype

    def swap_halves(t):
        # [t1, t2] -> [t2, t1]; the rotate_half sign is folded into the sin
        # table built in the wrapper.
        if use_roll:
            return pltpu.roll(t, shift=half, axis=-1)            # XLU slot
        # TODO(synk): for D % 128 != 0 a split-half RoPE formulation (two D/2
        # operands, additive QK^T split) would remove this lane shuffle.
        return jnp.concatenate([t[:, half:], t[:, :half]], axis=-1)

    def rope(t_f32, cos_f32, sin_signed_f32):
        return t_f32 * cos_f32 + swap_halves(t_f32) * sin_signed_f32

    def body(x_ref, cos_ref, sin_ref, wq_ref, wk_ref, wv_ref, mask_ref,
             o_ref, kt_sc, v_sc):
        qi = pl.program_id(2)
        q0 = pl.multiple_of(qi * TQ, TQ)

        # ---- build K^T (RoPE'd, transposed ONCE) and V per (batch, head) ----
        @pl.when(qi == 0)
        def _():
            x_all = x_ref[0]                                        # (S, H) cdt
            k = jnp.dot(x_all, wk_ref[0],
                        preferred_element_type=jnp.float32)         # (S, D) f32
            v = jnp.dot(x_all, wv_ref[0],
                        preferred_element_type=jnp.float32)         # (S, D) f32
            cos_all = cos_ref[0].astype(jnp.float32)
            sin_all = sin_ref[0].astype(jnp.float32)
            k_rot = rope(k, cos_all, sin_all)                       # (S, D) f32
            # Single transpose per (batch, head) -> scores below are a plain
            # NN matmul; no per-q-tile K transpose in the hot loop.
            kt_sc[...] = jnp.transpose(k_rot).astype(kt_sc.dtype)   # (D, S)
            v_sc[...] = v.astype(v_sc.dtype)

        # ---- Q projection + RoPE for this query tile (1/sqrt(D) folded) -----
        x_q = x_ref[0, pl.ds(q0, TQ), :]                            # (TQ, H)
        q = jnp.dot(x_q, wq_ref[0], preferred_element_type=jnp.float32)
        cos_q = cos_ref[0, pl.ds(q0, TQ), :].astype(jnp.float32)
        sin_q = sin_ref[0, pl.ds(q0, TQ), :].astype(jnp.float32)
        q_rot = (rope(q, cos_q, sin_q) * inv_scale).astype(cdt)     # (TQ, D)

        # ---- scores: plain NN (TQ, D) @ (D, S) matmul ------------------------
        # TODO(synk): flash-style KV-tile loop (online softmax, causal-frontier
        # trip count) would bound the (TQ, S) f32 temporaries for very long S.
        s = jnp.dot(q_rot, kt_sc[...], preferred_element_type=jnp.float32)

        if mask_mode == "explicit":
            s = s + mask_ref[0].astype(jnp.float32)
            s = jnp.maximum(s, neg_min)            # torch.max(w, finfo.min)
        elif mask_mode == "causal":
            rows = q0 + lax.broadcasted_iota(jnp.int32, (TQ, S), 0)
            cols = lax.broadcasted_iota(jnp.int32, (TQ, S), 1)
            s = jnp.where(cols <= rows, s, mask_value)   # single select

        # ---- softmax in f32 --------------------------------------------------
        m = jnp.max(s, axis=-1, keepdims=True)
        e = jnp.exp(s - m)
        denom = jnp.sum(e, axis=-1, keepdims=True)
        if approx_recip:
            p = e * pl.reciprocal(denom, approx=True)   # EUP slot (free-ish)
        else:
            p = e / denom
        p = p.astype(cdt)                               # matches .to(q.dtype)

        ctx = jnp.dot(p, v_sc[...], preferred_element_type=jnp.float32)
        o_ref[0, 0] = ctx.astype(o_ref.dtype)

    if mask_mode == "explicit":
        def kernel(x_ref, cos_ref, sin_ref, wq_ref, wk_ref, wv_ref, mask_ref,
                   o_ref, kt_sc, v_sc):
            body(x_ref, cos_ref, sin_ref, wq_ref, wk_ref, wv_ref, mask_ref,
                 o_ref, kt_sc, v_sc)
    else:
        def kernel(x_ref, cos_ref, sin_ref, wq_ref, wk_ref, wv_ref,
                   o_ref, kt_sc, v_sc):
            body(x_ref, cos_ref, sin_ref, wq_ref, wk_ref, wv_ref, None,
                 o_ref, kt_sc, v_sc)
    return kernel


# ---------------------------------------------------------------------------
# Kernel 2: output projection.  All heads + full W_o resident per row tile;
# f32 register accumulation, one lane-dense (TQ, H) store per step.
# ---------------------------------------------------------------------------
def _o_proj_kernel(ctx_ref, wo_ref, o_ref, *, num_heads):
    acc = jnp.dot(ctx_ref[0, 0], wo_ref[0], preferred_element_type=jnp.float32)
    for h in range(1, num_heads):               # static unroll, small num_heads
        acc = acc + jnp.dot(ctx_ref[0, h], wo_ref[h],
                            preferred_element_type=jnp.float32)
    o_ref[0] = acc.astype(o_ref.dtype)


# ---------------------------------------------------------------------------
# Wrapper helpers
# ---------------------------------------------------------------------------
def _pick_row_tile(n, dtype):
    """dtype-aware row tile: multiple of the sublane packing, prefer big."""
    min_rows = 8 * max(1, 4 // jnp.dtype(dtype).itemsize)   # 8 f32 / 16 bf16
    for t in (256, 128, 64, 32, 16, 8):
        if n % t == 0 and t % min_rows == 0:
            return t
    return n


def _vmem_limit_bytes():
    cap = None
    try:
        cap = getattr(pltpu.get_tpu_info(), "vmem_capacity_bytes", None)
    except Exception:
        cap = None
    if not cap:
        cap = 128 * 1024 * 1024
    # ~3/4 of physical VMEM, capped: 96 MiB on v5e/v6e, 48 MiB on v7x.
    return int(min(cap * 3 // 4, 96 * 1024 * 1024))


# ---------------------------------------------------------------------------
# Wrapper
# ---------------------------------------------------------------------------
def attention_forward(hidden_states, wq, wk, wv, wo, *, num_heads, max_tokens,
                      attention_mask=None, causal=False, position_ids=None,
                      rope_base=10000, q_tile=None, compute_dtype=None,
                      mask_value=None, approx_softmax_recip=True):
    """Forward pass of the PyTorch `Attention` module.

    attention_mask : optional additive mask, torch shape (B, 1, S, S); streamed
        one (TQ, S) tile per step in the compute dtype.  If None and
        `causal=True`, the causal mask is generated in-kernel (no HBM stream).
    compute_dtype  : dtype fed to the MXU (pass jnp.bfloat16 on v6e/v7x);
        accumulation and softmax stay in f32.
    """
    B, S, H = hidden_states.shape
    D = H // num_heads
    assert D * num_heads == H and D % 2 == 0
    orig_dtype = hidden_states.dtype
    if compute_dtype is None:
        compute_dtype = orig_dtype
    compute_dtype = jnp.dtype(compute_dtype)

    if q_tile is None:
        q_tile = _pick_row_tile(S, compute_dtype)
    assert S % q_tile == 0
    nq = S // q_tile

    if mask_value is None:
        mask_value = float(jnp.finfo(jnp.float32).min)

    vmem_limit = _vmem_limit_bytes()

    # ---- rotary table (mirrors Attention.rotary_emb); rotate_half sign folded
    # into the sin table so the kernel only needs a half swap.  Stored in the
    # compute dtype (halves its VMEM footprint in bf16 mode). --------------
    inv_freq = 1.0 / (rope_base ** (jnp.arange(0, D, 2, dtype=jnp.float32) / D))
    t = jnp.arange(max_tokens, dtype=jnp.float32)
    freqs = jnp.outer(t, inv_freq)                        # (max_tokens, D/2)
    emb = jnp.concatenate([freqs, freqs], axis=-1)        # (max_tokens, D)
    cos_tab = jnp.cos(emb).astype(compute_dtype)
    sign = jnp.concatenate([-jnp.ones((D // 2,), jnp.float32),
                            jnp.ones((D // 2,), jnp.float32)])
    sin_tab = (jnp.sin(emb) * sign).astype(compute_dtype)  # sign-folded sin

    if position_ids is None:
        assert S <= max_tokens
        cos = cos_tab[:S][None]                           # (1, S, D) shared
        sin = sin_tab[:S][None]
        cs_index = lambda b, h, qi: (0, 0, 0)
    else:
        cos = cos_tab[position_ids]                       # (B, S, D) gather
        sin = sin_tab[position_ids]
        cs_index = lambda b, h, qi: (b, 0, 0)

    # ---- pre-cast activations & weights ONCE in the wrapper -----------------
    x_c = hidden_states.astype(compute_dtype)
    wq_h = wq.T.reshape(H, num_heads, D).transpose(1, 0, 2).astype(compute_dtype)
    wk_h = wk.T.reshape(H, num_heads, D).transpose(1, 0, 2).astype(compute_dtype)
    wv_h = wv.T.reshape(H, num_heads, D).transpose(1, 0, 2).astype(compute_dtype)
    wo_h = wo.T.reshape(num_heads, D, H).astype(compute_dtype)

    if attention_mask is not None:
        mask_mode = "explicit"
        mask = attention_mask.reshape(B, S, S).astype(compute_dtype)
    elif causal:
        mask_mode = "causal"
        mask = None
    else:
        mask_mode = "none"
        mask = None

    use_roll = (D % 128 == 0)   # lane-aligned head_dim -> XLU roll; else concat

    kernel1 = _make_attn_kernel(
        seq_len=S, q_tile=q_tile, head_dim=D, mask_mode=mask_mode,
        mask_value=mask_value, compute_dtype=compute_dtype,
        approx_recip=approx_softmax_recip, use_roll=use_roll)

    in_specs = [
        pl.BlockSpec((1, S, H), lambda b, h, qi: (b, 0, 0)),    # x (pre-cast)
        pl.BlockSpec((1, S, D), cs_index),                      # cos
        pl.BlockSpec((1, S, D), cs_index),                      # sin (signed)
        pl.BlockSpec((1, H, D), lambda b, h, qi: (h, 0, 0)),    # W_q head slice
        pl.BlockSpec((1, H, D), lambda b, h, qi: (h, 0, 0)),    # W_k head slice
        pl.BlockSpec((1, H, D), lambda b, h, qi: (h, 0, 0)),    # W_v head slice
    ]
    args = [x_c, cos, sin, wq_h, wk_h, wv_h]
    if mask_mode == "explicit":
        in_specs.append(
            pl.BlockSpec((1, q_tile, S), lambda b, h, qi: (b, qi, 0)))
        args.append(mask)

    ctx = pl.pallas_call(
        kernel1,
        out_shape=jax.ShapeDtypeStruct((B, num_heads, S, D), compute_dtype),
        grid=(B, num_heads, nq),
        in_specs=in_specs,
        out_specs=pl.BlockSpec((1, 1, q_tile, D),
                               lambda b, h, qi: (b, h, qi, 0)),
        scratch_shapes=[pltpu.VMEM((D, S), compute_dtype),   # K^T (rope'd)
                        pltpu.VMEM((S, D), compute_dtype)],  # V
        compiler_params=pltpu.CompilerParams(
            dimension_semantics=("parallel", "parallel", "arbitrary"),
            vmem_limit_bytes=vmem_limit),
    )(*args)

    # ---- output projection: full W_o resident, lane-dense (TQ, H) stores ----
    # TODO(synk): for very large H (W_o > ~32 MiB) this would need K/N tiling.
    kernel2 = functools.partial(_o_proj_kernel, num_heads=num_heads)
    out = pl.pallas_call(
        kernel2,
        out_shape=jax.ShapeDtypeStruct((B, S, H), orig_dtype),
        grid=(B, nq),
        in_specs=[
            pl.BlockSpec((1, num_heads, q_tile, D), lambda b, qi: (b, 0, qi, 0)),
            pl.BlockSpec((num_heads, D, H), lambda b, qi: (0, 0, 0)),
        ],
        out_specs=pl.BlockSpec((1, q_tile, H), lambda b, qi: (b, qi, 0)),
        compiler_params=pltpu.CompilerParams(
            dimension_semantics=("parallel", "parallel"),
            vmem_limit_bytes=vmem_limit),
    )(ctx, wo_h)
    return out


# ---------------------------------------------------------------------------
# Pure-JAX reference (direct transcription of the PyTorch forward).
# ---------------------------------------------------------------------------
def attention_reference(x, wq, wk, wv, wo, *, num_heads, max_tokens,
                        attention_mask=None, position_ids=None, base=10000):
    B, S, H = x.shape
    D = H // num_heads
    q = (x @ wq.T).reshape(B, S, num_heads, D).transpose(0, 2, 1, 3)
    k = (x @ wk.T).reshape(B, S, num_heads, D).transpose(0, 2, 1, 3)
    v = (x @ wv.T).reshape(B, S, num_heads, D).transpose(0, 2, 1, 3)

    inv_freq = 1.0 / (base ** (jnp.arange(0, D, 2, dtype=jnp.float32) / D))
    t = jnp.arange(max_tokens, dtype=jnp.float32)
    emb = jnp.concatenate([jnp.outer(t, inv_freq)] * 2, axis=-1)
    cos_tab, sin_tab = jnp.cos(emb), jnp.sin(emb)
    if position_ids is None:
        position_ids = jnp.broadcast_to(jnp.arange(S, dtype=jnp.int32), (B, S))
    cos = cos_tab[position_ids][:, None, :, :]
    sin = sin_tab[position_ids][:, None, :, :]

    def rot_half(a):
        return jnp.concatenate([-a[..., D // 2:], a[..., :D // 2]], axis=-1)

    q = q * cos + rot_half(q) * sin
    k = k * cos + rot_half(k) * sin

    w = jnp.einsum("bhqd,bhkd->bhqk", q, k) / math.sqrt(D)
    if attention_mask is not None:
        w = w + attention_mask
        w = jnp.maximum(w, jnp.finfo(jnp.float32).min)
    w = jax.nn.softmax(w.astype(jnp.float32), axis=-1).astype(q.dtype)
    o = jnp.einsum("bhqk,bhkd->bhqd", w, v)
    o = o.transpose(0, 2, 1, 3).reshape(B, S, H)
    return o @ wo.T


# ---------------------------------------------------------------------------
if __name__ == "__main__":
    B, S, H = 2, 128, 256
    NUM_HEADS, MAX_TOKENS = 4, 256
    D = H // NUM_HEADS
    Q_TILE = 64  # 2 query tiles -> exercises the q-tile axis + K/V scratch reuse

    key = jax.random.PRNGKey(0)
    kx, kq, kk, kv, ko = jax.random.split(key, 5)

    x = jax.random.normal(kx, (B, S, H), dtype=jnp.float32)

    # nn.Linear(H, H, bias=False) weights, shape (out, in), U(-1/sqrt(H), 1/sqrt(H)).
    bound = 1.0 / math.sqrt(H)
    wq = jax.random.uniform(kq, (H, H), jnp.float32, -bound, bound)
    wk = jax.random.uniform(kk, (H, H), jnp.float32, -bound, bound)
    wv = jax.random.uniform(kv, (H, H), jnp.float32, -bound, bound)
    wo = jax.random.uniform(ko, (H, H), jnp.float32, -bound, bound)

    # HF-style causal additive mask (finfo.min on masked positions), (B,1,S,S).
    neg = float(jnp.finfo(jnp.float32).min)
    causal_add = jnp.where(jnp.arange(S)[None, :] <= jnp.arange(S)[:, None],
                           0.0, neg).astype(jnp.float32)
    attention_mask = jnp.broadcast_to(causal_add, (B, 1, S, S))
    position_ids = jnp.broadcast_to(jnp.arange(S, dtype=jnp.int32), (B, S))

    ref = attention_reference(x, wq, wk, wv, wo,
                              num_heads=NUM_HEADS, max_tokens=MAX_TOKENS,
                              attention_mask=attention_mask,
                              position_ids=position_ids)
    ref = np.asarray(jax.block_until_ready(ref))

    # --- 1) explicit streamed mask, f32 compute, exact softmax ---------------
    out1 = attention_forward(x, wq, wk, wv, wo,
                             num_heads=NUM_HEADS, max_tokens=MAX_TOKENS,
                             attention_mask=attention_mask,
                             position_ids=position_ids, q_tile=Q_TILE,
                             approx_softmax_recip=False)
    out1 = jax.block_until_ready(out1)
    np.testing.assert_allclose(np.asarray(out1), ref, rtol=1e-4, atol=1e-4)

    # --- 2) in-kernel causal mask (no HBM mask stream), shared rope table ----
    out2 = attention_forward(x, wq, wk, wv, wo,
                             num_heads=NUM_HEADS, max_tokens=MAX_TOKENS,
                             causal=True, position_ids=None, q_tile=Q_TILE,
                             approx_softmax_recip=False)
    out2 = jax.block_until_ready(out2)
    np.testing.assert_allclose(np.asarray(out2), ref, rtol=1e-4, atol=1e-4)

    # --- 3) bf16 MXU operands + EUP approx reciprocal (v6e/v7x fast path) ----
    out3 = attention_forward(x, wq, wk, wv, wo,
                             num_heads=NUM_HEADS, max_tokens=MAX_TOKENS,
                             causal=True, position_ids=None, q_tile=Q_TILE,
                             compute_dtype=jnp.bfloat16,
                             approx_softmax_recip=True)
    out3 = jax.block_until_ready(out3)
    np.testing.assert_allclose(np.asarray(out3, dtype=np.float32), ref,
                               rtol=5e-2, atol=5e-2)

    print("KERNEL_OK")
</pallas_src>

<mosaic_0001>
module attributes {stable_mosaic.version = 11 : i64} {
  func.func @kernel(%arg0: i32, %arg1: i32, %arg2: i32, %arg3: memref<1x128x256xf32, #tpu.memory_space<vmem>>, %arg4: memref<1x128x64xf32, #tpu.memory_space<vmem>>, %arg5: memref<1x128x64xf32, #tpu.memory_space<vmem>>, %arg6: memref<1x256x64xf32, #tpu.memory_space<vmem>>, %arg7: memref<1x256x64xf32, #tpu.memory_space<vmem>>, %arg8: memref<1x256x64xf32, #tpu.memory_space<vmem>>, %arg9: memref<1x64x128xf32, #tpu.memory_space<vmem>>, %arg10: memref<1x1x64x64xf32, #tpu.memory_space<vmem>>, %arg11: memref<64x128xf32, #tpu.memory_space<vmem>>, %arg12: memref<128x64xf32, #tpu.memory_space<vmem>>) attributes {dimension_semantics = [#tpu.dimension_semantics<parallel>, #tpu.dimension_semantics<parallel>, #tpu.dimension_semantics<arbitrary>], iteration_bounds = array<i64: 2, 4, 2>, scalar_prefetch = 0 : i64, scratch_operands = 2 : i64, tpu.core_type = #tpu.core_type<tc>, window_params = [{transform_indices = @transform_0, window_bounds = array<i64: 1, 128, 256>}, {transform_indices = @transform_1, window_bounds = array<i64: 1, 128, 64>}, {transform_indices = @transform_2, window_bounds = array<i64: 1, 128, 64>}, {transform_indices = @transform_3, window_bounds = array<i64: 1, 256, 64>}, {transform_indices = @transform_4, window_bounds = array<i64: 1, 256, 64>}, {transform_indices = @transform_5, window_bounds = array<i64: 1, 256, 64>}, {transform_indices = @transform_6, window_bounds = array<i64: 1, 64, 128>}, {transform_indices = @transform_7, window_bounds = array<i64: 1, 1, 64, 64>}]} {
    %c64_i32 = arith.constant 64 : i32
    %0 = arith.muli %arg2, %c64_i32 : i32
    %1 = tpu.assume_multiple %0, 64 : i32
    %c0_i32 = arith.constant 0 : i32
    %2 = arith.cmpi eq, %arg2, %c0_i32 : i32
    %3 = arith.extui %2 : i1 to i32
    %c0_i32_0 = arith.constant 0 : i32
    %4 = arith.cmpi ne, %3, %c0_i32_0 : i32
    scf.if %4 {
      %c0_26 = arith.constant 0 : index
      %c0_27 = arith.constant 0 : index
      %c0_28 = arith.constant 0 : index
      %46 = vector.load %arg3[%c0_26, %c0_27, %c0_28] : memref<1x128x256xf32, #tpu.memory_space<vmem>>, vector<1x128x256xf32>
      %47 = vector.shape_cast %46 : vector<1x128x256xf32> to vector<128x256xf32>
      %c0_29 = arith.constant 0 : index
      %c0_30 = arith.constant 0 : index
      %c0_31 = arith.constant 0 : index
      %48 = vector.load %arg7[%c0_29, %c0_30, %c0_31] : memref<1x256x64xf32, #tpu.memory_space<vmem>>, vector<1x256x64xf32>
      %49 = vector.shape_cast %48 : vector<1x256x64xf32> to vector<256x64xf32>
      %cst_32 = arith.constant dense<0.000000e+00> : vector<128x64xf32>
      %50 = tpu.matmul %47, %49, %cst_32 {dimension_numbers = #tpu.dot_dimension_numbers<[1], [0], [0], [1], [0, 0, 1, 1], [], []>} : vector<128x256xf32>, vector<256x64xf32>, vector<128x64xf32> -> vector<128x64xf32>
      %c0_33 = arith.constant 0 : index
      %c0_34 = arith.constant 0 : index
      %c0_35 = arith.constant 0 : index
      %51 = vector.load %arg8[%c0_33, %c0_34, %c0_35] : memref<1x256x64xf32, #tpu.memory_space<vmem>>, vector<1x256x64xf32>
      %52 = vector.shape_cast %51 : vector<1x256x64xf32> to vector<256x64xf32>
      %cst_36 = arith.constant dense<0.000000e+00> : vector<128x64xf32>
      %53 = tpu.matmul %47, %52, %cst_36 {dimension_numbers = #tpu.dot_dimension_numbers<[1], [0], [0], [1], [0, 0, 1, 1], [], []>} : vector<128x256xf32>, vector<256x64xf32>, vector<128x64xf32> -> vector<128x64xf32>
      %c0_37 = arith.constant 0 : index
      %c0_38 = arith.constant 0 : index
      %c0_39 = arith.constant 0 : index
      %54 = vector.load %arg4[%c0_37, %c0_38, %c0_39] : memref<1x128x64xf32, #tpu.memory_space<vmem>>, vector<1x128x64xf32>
      %55 = vector.shape_cast %54 : vector<1x128x64xf32> to vector<128x64xf32>
      %c0_40 = arith.constant 0 : index
      %c0_41 = arith.constant 0 : index
      %c0_42 = arith.constant 0 : index
      %56 = vector.load %arg5[%c0_40, %c0_41, %c0_42] : memref<1x128x64xf32, #tpu.memory_space<vmem>>, vector<1x128x64xf32>
      %57 = vector.shape_cast %56 : vector<1x128x64xf32> to vector<128x64xf32>
      %58 = arith.mulf %50, %55 : vector<128x64xf32>
      %59 = vector.extract_strided_slice %50 {offsets = [0, 32], sizes = [128, 32], strides = [1, 1]} : vector<128x64xf32> to vector<128x32xf32>
      %60 = vector.extract_strided_slice %50 {offsets = [0, 0], sizes = [128, 32], strides = [1, 1]} : vector<128x64xf32> to vector<128x32xf32>
      %61 = tpu.concatenate %59, %60 in 1 : vector<128x32xf32>, vector<128x32xf32> -> vector<128x64xf32>
      %62 = arith.mulf %61, %57 : vector<128x64xf32>
      %63 = arith.addf %58, %62 : vector<128x64xf32>
      %64 = tpu.transpose %63, [1, 0] : vector<128x64xf32> -> vector<64x128xf32>
      %c0_43 = arith.constant 0 : index
      %c0_44 = arith.constant 0 : index
      %65 = vector.load %arg11[%c0_43, %c0_44] : memref<64x128xf32, #tpu.memory_space<vmem>>, vector<64x128xf32>
      tpu.vector_store %arg11[%c0_43, %c0_44], %64 {strides = array<i32>} : memref<64x128xf32, #tpu.memory_space<vmem>>, vector<64x128xf32>,
      %c0_45 = arith.constant 0 : index
      %c0_46 = arith.constant 0 : index
      %66 = vector.load %arg12[%c0_45, %c0_46] : memref<128x64xf32, #tpu.memory_space<vmem>>, vector<128x64xf32>
      tpu.vector_store %arg12[%c0_45, %c0_46], %53 {strides = array<i32>} : memref<128x64xf32, #tpu.memory_space<vmem>>, vector<128x64xf32>,
    } else {
    }
    %c0 = arith.constant 0 : index
    %5 = arith.index_cast %1 : i32 to index
    %c0_1 = arith.constant 0 : index
    %6 = vector.load %arg3[%c0, %5, %c0_1] : memref<1x128x256xf32, #tpu.memory_space<vmem>>, vector<1x64x256xf32>
    %7 = vector.shape_cast %6 : vector<1x64x256xf32> to vector<64x256xf32>
    %c0_2 = arith.constant 0 : index
    %c0_3 = arith.constant 0 : index
    %c0_4 = arith.constant 0 : index
    %8 = vector.load %arg6[%c0_2, %c0_3, %c0_4] : memref<1x256x64xf32, #tpu.memory_space<vmem>>, vector<1x256x64xf32>
    %9 = vector.shape_cast %8 : vector<1x256x64xf32> to vector<256x64xf32>
    %cst = arith.constant dense<0.000000e+00> : vector<64x64xf32>
    %10 = tpu.matmul %7, %9, %cst {dimension_numbers = #tpu.dot_dimension_numbers<[1], [0], [0], [1], [0, 0, 1, 1], [], []>} : vector<64x256xf32>, vector<256x64xf32>, vector<64x64xf32> -> vector<64x64xf32>
    %c0_5 = arith.constant 0 : index
    %11 = arith.index_cast %1 : i32 to index
    %c0_6 = arith.constant 0 : index
    %12 = vector.load %arg4[%c0_5, %11, %c0_6] : memref<1x128x64xf32, #tpu.memory_space<vmem>>, vector<1x64x64xf32>
    %13 = vector.shape_cast %12 : vector<1x64x64xf32> to vector<64x64xf32>
    %c0_7 = arith.constant 0 : index
    %14 = arith.index_cast %1 : i32 to index
    %c0_8 = arith.constant 0 : index
    %15 = vector.load %arg5[%c0_7, %14, %c0_8] : memref<1x128x64xf32, #tpu.memory_space<vmem>>, vector<1x64x64xf32>
    %16 = vector.shape_cast %15 : vector<1x64x64xf32> to vector<64x64xf32>
    %17 = arith.mulf %10, %13 : vector<64x64xf32>
    %18 = vector.extract_strided_slice %10 {offsets = [0, 32], sizes = [64, 32], strides = [1, 1]} : vector<64x64xf32> to vector<64x32xf32>
    %19 = vector.extract_strided_slice %10 {offsets = [0, 0], sizes = [64, 32], strides = [1, 1]} : vector<64x64xf32> to vector<64x32xf32>
    %20 = tpu.concatenate %18, %19 in 1 : vector<64x32xf32>, vector<64x32xf32> -> vector<64x64xf32>
    %21 = arith.mulf %20, %16 : vector<64x64xf32>
    %22 = arith.addf %17, %21 : vector<64x64xf32>
    %cst_9 = arith.constant 1.250000e-01 : f32
    %23 = vector.broadcast %cst_9 : f32 to vector<64x64xf32>
    %24 = arith.mulf %22, %23 : vector<64x64xf32>
    %c0_10 = arith.constant 0 : index
    %c0_11 = arith.constant 0 : index
    %25 = vector.load %arg11[%c0_10, %c0_11] : memref<64x128xf32, #tpu.memory_space<vmem>>, vector<64x128xf32>
    %cst_12 = arith.constant dense<0.000000e+00> : vector<64x128xf32>
    %26 = tpu.matmul %24, %25, %cst_12 {dimension_numbers = #tpu.dot_dimension_numbers<[1], [0], [0], [1], [0, 0, 1, 1], [], []>} : vector<64x64xf32>, vector<64x128xf32>, vector<64x128xf32> -> vector<64x128xf32>
    %c0_13 = arith.constant 0 : index
    %c0_14 = arith.constant 0 : index
    %c0_15 = arith.constant 0 : index
    %27 = vector.load %arg9[%c0_13, %c0_14, %c0_15] : memref<1x64x128xf32, #tpu.memory_space<vmem>>, vector<1x64x128xf32>
    %28 = vector.shape_cast %27 : vector<1x64x128xf32> to vector<64x128xf32>
    %29 = arith.addf %26, %28 : vector<64x128xf32>
    %cst_16 = arith.constant -3.40282347E+38 : f32
    %30 = vector.broadcast %cst_16 : f32 to vector<64x128xf32>
    %31 = arith.maximumf %29, %30 : vector<64x128xf32>
    %cst_17 = arith.constant dense<0xFF800000> : vector<64xf32>
    %32 = vector.multi_reduction <maximumf>, %31, %cst_17 [1] : vector<64x128xf32> to vector<64xf32>
    %33 = vector.shape_cast %32 : vector<64xf32> to vector<64x1xf32>
    %34 = vector.broadcast %33 : vector<64x1xf32> to vector<64x128xf32>
    %35 = arith.subf %31, %34 : vector<64x128xf32>
    %36 = math.exp %35 : vector<64x128xf32>
    %cst_18 = arith.constant dense<0.000000e+00> : vector<64xf32>
    %37 = vector.multi_reduction <add>, %36, %cst_18 [1] : vector<64x128xf32> to vector<64xf32>
    %38 = vector.shape_cast %37 : vector<64xf32> to vector<64x1xf32>
    %39 = vector.broadcast %38 : vector<64x1xf32> to vector<64x128xf32>
    %40 = arith.divf %36, %39 : vector<64x128xf32>
    %c0_19 = arith.constant 0 : index
    %c0_20 = arith.constant 0 : index
    %41 = vector.load %arg12[%c0_19, %c0_20] : memref<128x64xf32, #tpu.memory_space<vmem>>, vector<128x64xf32>
    %cst_21 = arith.constant dense<0.000000e+00> : vector<64x64xf32>
    %42 = tpu.matmul %40, %41, %cst_21 {dimension_numbers = #tpu.dot_dimension_numbers<[1], [0], [0], [1], [0, 0, 1, 1], [], []>} : vector<64x128xf32>, vector<128x64xf32>, vector<64x64xf32> -> vector<64x64xf32>
    %c0_22 = arith.constant 0 : index
    %c0_23 = arith.constant 0 : index
    %c0_24 = arith.constant 0 : index
    %c0_25 = arith.constant 0 : index
    %43 = vector.load %arg10[%c0_22, %c0_23, %c0_24, %c0_25] : memref<1x1x64x64xf32, #tpu.memory_space<vmem>>, vector<1x1x64x64xf32>
    %44 = vector.shape_cast %43 : vector<1x1x64x64xf32> to vector<64x64xf32>
    %45 = vector.shape_cast %42 : vector<64x64xf32> to vector<1x1x64x64xf32>
    tpu.vector_store %arg10[%c0_22, %c0_23, %c0_24, %c0_25], %45 {strides = array<i32>} : memref<1x1x64x64xf32, #tpu.memory_space<vmem>>, vector<1x1x64x64xf32>,
    return
  }
  func.func @transform_0(%arg0: i32, %arg1: i32, %arg2: i32) -> (i32, i32, i32) {
    %c0_i32 = arith.constant 0 : i32
    %c0_i32_0 = arith.constant 0 : i32
    %c0_i32_1 = arith.constant 0 : i32
    return %arg0, %c0_i32, %c0_i32_0 : i32, i32, i32
  }
  func.func @transform_1(%arg0: i32, %arg1: i32, %arg2: i32) -> (i32, i32, i32) {
    %c0_i32 = arith.constant 0 : i32
    %c0_i32_0 = arith.constant 0 : i32
    %c0_i32_1 = arith.constant 0 : i32
    return %arg0, %c0_i32, %c0_i32_0 : i32, i32, i32
  }
  func.func @transform_2(%arg0: i32, %arg1: i32, %arg2: i32) -> (i32, i32, i32) {
    %c0_i32 = arith.constant 0 : i32
    %c0_i32_0 = arith.constant 0 : i32
    %c0_i32_1 = arith.constant 0 : i32
    return %arg0, %c0_i32, %c0_i32_0 : i32, i32, i32
  }
  func.func @transform_3(%arg0: i32, %arg1: i32, %arg2: i32) -> (i32, i32, i32) {
    %c0_i32 = arith.constant 0 : i32
    %c0_i32_0 = arith.constant 0 : i32
    %c0_i32_1 = arith.constant 0 : i32
    return %arg1, %c0_i32, %c0_i32_0 : i32, i32, i32
  }
  func.func @transform_4(%arg0: i32, %arg1: i32, %arg2: i32) -> (i32, i32, i32) {
    %c0_i32 = arith.constant 0 : i32
    %c0_i32_0 = arith.constant 0 : i32
    %c0_i32_1 = arith.constant 0 : i32
    return %arg1, %c0_i32, %c0_i32_0 : i32, i32, i32
  }
  func.func @transform_5(%arg0: i32, %arg1: i32, %arg2: i32) -> (i32, i32, i32) {
    %c0_i32 = arith.constant 0 : i32
    %c0_i32_0 = arith.constant 0 : i32
    %c0_i32_1 = arith.constant 0 : i32
    return %arg1, %c0_i32, %c0_i32_0 : i32, i32, i32
  }
  func.func @transform_6(%arg0: i32, %arg1: i32, %arg2: i32) -> (i32, i32, i32) {
    %c0_i32 = arith.constant 0 : i32
    %c0_i32_0 = arith.constant 0 : i32
    return %arg0, %arg2, %c0_i32 : i32, i32, i32
  }
  func.func @transform_7(%arg0: i32, %arg1: i32, %arg2: i32) -> (i32, i32, i32, i32) {
    %c0_i32 = arith.constant 0 : i32
    %c0_i32_0 = arith.constant 0 : i32
    return %arg0, %arg1, %arg2, %c0_i32 : i32, i32, i32, i32
  }
}

</mosaic_0001>

<llo_original>
// kernel: tpu_custom_call.1
$region0: #{tpu_custom_call.1}
  #allocation0 [shape = 'u32[]', space=smem, size = 0x4, offset = 0x4, fixed_abs, tag = 'smem constant byte address 0x4 - core index']
  #allocation1 [shape = 'u32[144,128]{1,0:T(1,128)}', space=vmem, size = 0x12000, scoped, tag = 'internal scratch']
  #allocation2 [shape = 'f32[64,128]{1,0:T(8,128)}', space=vmem, size = 0x8000, scoped, tag = 'scratch operand']
  #allocation3 [shape = 'f32[128,64]{1,0:T(8,128)}', space=vmem, size = 0x10000, scoped, tag = 'scratch operand']
  %s0 = inlined_call_operand.vmem [shape: f32[2,128,256], index: 0, kind: input, shape index: {}]
  %s1 = inlined_call_operand.vmem [shape: f32[2,128,64], index: 1, kind: input, shape index: {}]
  %s2 = inlined_call_operand.vmem [shape: f32[2,128,64], index: 2, kind: input, shape index: {}]
  %s3 = inlined_call_operand.vmem [shape: f32[4,256,64], index: 3, kind: input, shape index: {}]
  %s4 = inlined_call_operand.vmem [shape: f32[4,256,64], index: 4, kind: input, shape index: {}]
  %s5 = inlined_call_operand.vmem [shape: f32[4,256,64], index: 5, kind: input, shape index: {}]
  %s6 = inlined_call_operand.vmem [shape: f32[2,128,128], index: 6, kind: input, shape index: {}]
  %s7 = inlined_call_operand.vmem [shape: f32[2,4,128,64], index: 7, kind: output, shape index: {}]
  %s8 = sld [smem:[#allocation0]]
  $region65: #{tpu_custom_call.1} parent=0
    _
  %s10 = ssub.s32 1, %s8
  %s11 = scalar_select 0, %s10, %s8
  loop: start=0, step=1, limit=18
  $region2: #{tpu_custom_call.1} parent=0 // loop_pre_header
    _
  $region3: #{tpu_custom_call.1} parent=0 // loop_header
    %s13 = sphi 0, %s17
    %p14 = scmp.ge.s32.totalorder %s13, 18
    %s20 = sphi 0, %s39
    %s21 = sphi 0, %s35
    %s22 = sphi 0, %s31
    %s23 = sphi 0, %s20
    %s24 = sphi 0, %s21
    %s25 = sphi 0, %s22
    %s26 = sphi 0, %s23
    %s27 = sphi 0, %s24
    %s28 = sphi 0, %s25
    %s42 = sphi 0, %s44
    %s45 = sphi 0, %s42
    %s46 = sphi 0, %s45
    %s62 = sphi 0, %s46
    %s68 = sphi 0, %s70
    %s71 = sphi 0, %s68
    %s72 = sphi 0, %s71
    %s88 = sphi 0, %s72
    %s94 = sphi 0, %s96
    %s97 = sphi 0, %s94
    %s98 = sphi 0, %s97
    %s114 = sphi 0, %s98
    %s120 = sphi 0, %s122
    %s123 = sphi 0, %s120
    %s124 = sphi 0, %s123
    %s140 = sphi 0, %s124
    %s146 = sphi 0, %s148
    %s149 = sphi 0, %s146
    %s150 = sphi 0, %s149
    %s166 = sphi 0, %s150
    %s172 = sphi 0, %s174
    %s175 = sphi 0, %s172
    %s176 = sphi 0, %s175
    %s192 = sphi 0, %s176
    %s200 = sphi 0, %s202
    %s203 = sphi 0, %s200
    %s204 = sphi 0, %s203
    %s220 = sphi 0, %s204
    %s230 = sphi 0, %s232
    %s233 = sphi 0, %s230
    %s234 = sphi 0, %s233
    %s250 = sphi 0, %s234
  $region4: #{tpu_custom_call.1} parent=0 // loop_header_branch
    %16 = sbr.rel (%p14) target = $region8
  $region5: #{tpu_custom_call.1} parent=0 // loop_body
    %s18 = ssub.s32 %s13, 1
    %s19 = ssub.s32 %s13, 2
    %s29 = sadd.s32 1, %s22
    %p30 = scmp.ge.s32.totalorder %s29, 2
    %s31 = scalar_select %p30, 0, %s29
    %s32 = sadd.s32 1, %s21
    %s33 = scalar_select %p30, %s32, %s21
    %p34 = scmp.ge.s32.totalorder %s33, 4
    %s35 = scalar_select %p34, 0, %s33
    %s36 = sadd.s32 1, %s20
    %s37 = scalar_select %p34, %s36, %s20
    %p38 = scmp.ge.s32.totalorder %s37, 2
    %s39 = scalar_select %p38, 0, %s37
    %s40 = ssub.s32 %s20, %s39
    %p41 = scmp.eq.s32.totalorder %s40, 0
    %s43 = sadd.s32 %s42, 1
    %s44 = scalar_select %p41, %s42, %s43
    %p47 = pneg %p41
    %p48 = scmp.eq.s32.totalorder %s13, 15
    %p49 = por %p47, %p48
    %p50 = scmp.ne.s32.totalorder %s42, %s45
    %p51 = scmp.eq.s32.totalorder %s13, 0
    %p52 = por %p50, %p51
    %p53 = scmp.ne.s32.totalorder %s42, %s45
    %p54 = scmp.eq.s32.totalorder %s18, 15
    %p55 = por %p53, %p54
    %p56 = scmp.ne.s32.totalorder %s45, %s46
    %p57 = scmp.eq.s32.totalorder %s18, 0
    %p58 = por %p56, %p57
    %p59 = scmp.ne.s32.totalorder %s45, %s46
    %p60 = scmp.eq.s32.totalorder %s19, 15
    %p61 = por %p59, %p60
    %p63 = scmp.ne.s32.totalorder %s46, %s62
    %p64 = scmp.eq.s32.totalorder %s19, 0
    %p65 = por %p63, %p64
    %s66 = ssub.s32 %s20, %s39
    %p67 = scmp.eq.s32.totalorder %s66, 0
    %s69 = sadd.s32 %s68, 1
    %s70 = scalar_select %p67, %s68, %s69
    %p73 = pneg %p67
    %p74 = scmp.eq.s32.totalorder %s13, 15
    %p75 = por %p73, %p74
    %p76 = scmp.ne.s32.totalorder %s68, %s71
    %p77 = scmp.eq.s32.totalorder %s13, 0
    %p78 = por %p76, %p77
    %p79 = scmp.ne.s32.totalorder %s68, %s71
    %p80 = scmp.eq.s32.totalorder %s18, 15
    %p81 = por %p79, %p80
    %p82 = scmp.ne.s32.totalorder %s71, %s72
    %p83 = scmp.eq.s32.totalorder %s18, 0
    %p84 = por %p82, %p83
    %p85 = scmp.ne.s32.totalorder %s71, %s72
    %p86 = scmp.eq.s32.totalorder %s19, 15
    %p87 = por %p85, %p86
    %p89 = scmp.ne.s32.totalorder %s72, %s88
    %p90 = scmp.eq.s32.totalorder %s19, 0
    %p91 = por %p89, %p90
    %s92 = ssub.s32 %s20, %s39
    %p93 = scmp.eq.s32.totalorder %s92, 0
    %s95 = sadd.s32 %s94, 1
    %s96 = scalar_select %p93, %s94, %s95
    %p99 = pneg %p93
    %p100 = scmp.eq.s32.totalorder %s13, 15
    %p101 = por %p99, %p100
    %p102 = scmp.ne.s32.totalorder %s94, %s97
    %p103 = scmp.eq.s32.totalorder %s13, 0
    %p104 = por %p102, %p103
    %p105 = scmp.ne.s32.totalorder %s94, %s97
    %p106 = scmp.eq.s32.totalorder %s18, 15
    %p107 = por %p105, %p106
    %p108 = scmp.ne.s32.totalorder %s97, %s98
    %p109 = scmp.eq.s32.totalorder %s18, 0
    %p110 = por %p108, %p109
    %p111 = scmp.ne.s32.totalorder %s97, %s98
    %p112 = scmp.eq.s32.totalorder %s19, 15
    %p113 = por %p111, %p112
    %p115 = scmp.ne.s32.totalorder %s98, %s114
    %p116 = scmp.eq.s32.totalorder %s19, 0
    %p117 = por %p115, %p116
    %s118 = ssub.s32 %s21, %s35
    %p119 = scmp.eq.s32.totalorder %s118, 0
    %s121 = sadd.s32 %s120, 1
    %s122 = scalar_select %p119, %s120, %s121
    %p125 = pneg %p119
    %p126 = scmp.eq.s32.totalorder %s13, 15
    %p127 = por %p125, %p126
    %p128 = scmp.ne.s32.totalorder %s120, %s123
    %p129 = scmp.eq.s32.totalorder %s13, 0
    %p130 = por %p128, %p129
    %p131 = scmp.ne.s32.totalorder %s120, %s123
    %p132 = scmp.eq.s32.totalorder %s18, 15
    %p133 = por %p131, %p132
    %p134 = scmp.ne.s32.totalorder %s123, %s124
    %p135 = scmp.eq.s32.totalorder %s18, 0
    %p136 = por %p134, %p135
    %p137 = scmp.ne.s32.totalorder %s123, %s124
    %p138 = scmp.eq.s32.totalorder %s19, 15
    %p139 = por %p137, %p138
    %p141 = scmp.ne.s32.totalorder %s124, %s140
    %p142 = scmp.eq.s32.totalorder %s19, 0
    %p143 = por %p141, %p142
    %s144 = ssub.s32 %s21, %s35
    %p145 = scmp.eq.s32.totalorder %s144, 0
    %s147 = sadd.s32 %s146, 1
    %s148 = scalar_select %p145, %s146, %s147
    %p151 = pneg %p145
    %p152 = scmp.eq.s32.totalorder %s13, 15
    %p153 = por %p151, %p152
    %p154 = scmp.ne.s32.totalorder %s146, %s149
    %p155 = scmp.eq.s32.totalorder %s13, 0
    %p156 = por %p154, %p155
    %p157 = scmp.ne.s32.totalorder %s146, %s149
    %p158 = scmp.eq.s32.totalorder %s18, 15
    %p159 = por %p157, %p158
    %p160 = scmp.ne.s32.totalorder %s149, %s150
    %p161 = scmp.eq.s32.totalorder %s18, 0
    %p162 = por %p160, %p161
    %p163 = scmp.ne.s32.totalorder %s149, %s150
    %p164 = scmp.eq.s32.totalorder %s19, 15
    %p165 = por %p163, %p164
    %p167 = scmp.ne.s32.totalorder %s150, %s166
    %p168 = scmp.eq.s32.totalorder %s19, 0
    %p169 = por %p167, %p168
    %s170 = ssub.s32 %s21, %s35
    %p171 = scmp.eq.s32.totalorder %s170, 0
    %s173 = sadd.s32 %s172, 1
    %s174 = scalar_select %p171, %s172, %s173
    %p177 = pneg %p171
    %p178 = scmp.eq.s32.totalorder %s13, 15
    %p179 = por %p177, %p178
    %p180 = scmp.ne.s32.totalorder %s172, %s175
    %p181 = scmp.eq.s32.totalorder %s13, 0
    %p182 = por %p180, %p181
    %p183 = scmp.ne.s32.totalorder %s172, %s175
    %p184 = scmp.eq.s32.totalorder %s18, 15
    %p185 = por %p183, %p184
    %p186 = scmp.ne.s32.totalorder %s175, %s176
    %p187 = scmp.eq.s32.totalorder %s18, 0
    %p188 = por %p186, %p187
    %p189 = scmp.ne.s32.totalorder %s175, %s176
    %p190 = scmp.eq.s32.totalorder %s19, 15
    %p191 = por %p189, %p190
    %p193 = scmp.ne.s32.totalorder %s176, %s192
    %p194 = scmp.eq.s32.totalorder %s19, 0
    %p195 = por %p193, %p194
    %s196 = ssub.s32 %s20, %s39
    %s197 = ssub.s32 %s22, %s31
    %s198 = sor.u32 %s196, %s197
    %p199 = scmp.eq.s32.totalorder %s198, 0
    %s201 = sadd.s32 %s200, 1
    %s202 = scalar_select %p199, %s200, %s201
    %p205 = pneg %p199
    %p206 = scmp.eq.s32.totalorder %s13, 15
    %p207 = por %p205, %p206
    %p208 = scmp.ne.s32.totalorder %s200, %s203
    %p209 = scmp.eq.s32.totalorder %s13, 0
    %p210 = por %p208, %p209
    %p211 = scmp.ne.s32.totalorder %s200, %s203
    %p212 = scmp.eq.s32.totalorder %s18, 15
    %p213 = por %p211, %p212
    %p214 = scmp.ne.s32.totalorder %s203, %s204
    %p215 = scmp.eq.s32.totalorder %s18, 0
    %p216 = por %p214, %p215
    %p217 = scmp.ne.s32.totalorder %s203, %s204
    %p218 = scmp.eq.s32.totalorder %s19, 15
    %p219 = por %p217, %p218
    %p221 = scmp.ne.s32.totalorder %s204, %s220
    %p222 = scmp.eq.s32.totalorder %s19, 0
    %p223 = por %p221, %p222
    %s224 = ssub.s32 %s20, %s39
    %s225 = ssub.s32 %s21, %s35
    %s226 = sor.u32 %s224, %s225
    %s227 = ssub.s32 %s22, %s31
    %s228 = sor.u32 %s226, %s227
    %p229 = scmp.eq.s32.totalorder %s228, 0
    %s231 = sadd.s32 %s230, 1
    %s232 = scalar_select %p229, %s230, %s231
    %p235 = pneg %p229
    %p236 = scmp.eq.s32.totalorder %s13, 15
    %p237 = por %p235, %p236
    %p238 = scmp.ne.s32.totalorder %s230, %s233
    %p239 = scmp.eq.s32.totalorder %s13, 0
    %p240 = por %p238, %p239
    %p241 = scmp.ne.s32.totalorder %s230, %s233
    %p242 = scmp.eq.s32.totalorder %s18, 15
    %p243 = por %p241, %p242
    %p244 = scmp.ne.s32.totalorder %s233, %s234
    %p245 = scmp.eq.s32.totalorder %s18, 0
    %p246 = por %p244, %p245
    %p247 = scmp.ne.s32.totalorder %s233, %s234
    %p248 = scmp.eq.s32.totalorder %s19, 15
    %p249 = por %p247, %p248
    %p251 = scmp.ne.s32.totalorder %s234, %s250
    %p252 = scmp.eq.s32.totalorder %s19, 0
    %p253 = por %p251, %p252
    %p254 = scmp.le.s32.totalorder 1, %s13
    %p255 = scmp.lt.s32.totalorder %s13, 17
    %p256 = pnand %p254, %p255
    %p257 = pneg %p256
    // Predicated region
    $region9: #{tpu_custom_call.1} parent=5 // pred_check
      _
    $region10: #{tpu_custom_call.1} parent=5 // pred_check_branch
      %259 = sbr.rel (%p256) target = $region12
    $region11: #{tpu_custom_call.1} parent=5 // pred_region
      %s260 = ssub.s32 %s13, 1
    $region12: #{tpu_custom_call.1} parent=5 // pred_fallthru
      _
    %p261 = scmp.lt.s32.totalorder %s13, 16
    // Predicated region
    $region13: #{tpu_custom_call.1} parent=5 // pred_check
      %p262 = pneg %p261
    $region14: #{tpu_custom_call.1} parent=5 // pred_check_branch
      %264 = sbr.rel (%p262) target = $region16
    $region15: #{tpu_custom_call.1} parent=5 // pred_region
      // Predicated region
      $region17: #{tpu_custom_call.1} parent=15 // pred_check
        %p265 = pneg %p52
      $region18: #{tpu_custom_call.1} parent=15 // pred_check_branch
        %267 = sbr.rel (%p265) target = $region20
      $region19: #{tpu_custom_call.1} parent=15 // pred_region
        %p268 = scmp.lt.s32.totalorder %s20, 1
        %s269 = scalar_select %p268, %s20, 1
        %s270 = smul.addr %s269, 32
        %s271 = smul.addr %s270, 8
        %s272 = scalar_lea.vmem %s0, %s271
      $region20: #{tpu_custom_call.1} parent=15 // pred_fallthru
        _
      // Predicated region
      $region21: #{tpu_custom_call.1} parent=15 // pred_check
        %p273 = pneg %p78
      $region22: #{tpu_custom_call.1} parent=15 // pred_check_branch
        %275 = sbr.rel (%p273) target = $region24
      $region23: #{tpu_custom_call.1} parent=15 // pred_region
        %p276 = scmp.lt.s32.totalorder %s20, 1
        %s277 = scalar_select %p276, %s20, 1
        %s278 = smul.addr %s277, 16
        %s279 = smul.addr %s278, 8
        %s280 = scalar_lea.vmem %s1, %s279
      $region24: #{tpu_custom_call.1} parent=15 // pred_fallthru
        _
      // Predicated region
      $region25: #{tpu_custom_call.1} parent=15 // pred_check
        %p281 = pneg %p104
      $region26: #{tpu_custom_call.1} parent=15 // pred_check_branch
        %283 = sbr.rel (%p281) target = $region28
      $region27: #{tpu_custom_call.1} parent=15 // pred_region
        %p284 = scmp.lt.s32.totalorder %s20, 1
        %s285 = scalar_select %p284, %s20, 1
        %s286 = smul.addr %s285, 16
        %s287 = smul.addr %s286, 8
        %s288 = scalar_lea.vmem %s2, %s287
      $region28: #{tpu_custom_call.1} parent=15 // pred_fallthru
        _
      // Predicated region
      $region29: #{tpu_custom_call.1} parent=15 // pred_check
        %p289 = pneg %p130
      $region30: #{tpu_custom_call.1} parent=15 // pred_check_branch
        %291 = sbr.rel (%p289) target = $region32
      $region31: #{tpu_custom_call.1} parent=15 // pred_region
        %p292 = scmp.lt.s32.totalorder %s21, 3
        %s293 = scalar_select %p292, %s21, 3
        %s294 = smul.addr %s293, 32
        %s295 = smul.addr %s294, 8
        %s296 = scalar_lea.vmem %s3, %s295
      $region32: #{tpu_custom_call.1} parent=15 // pred_fallthru
        _
      // Predicated region
      $region33: #{tpu_custom_call.1} parent=15 // pred_check
        %p297 = pneg %p156
      $region34: #{tpu_custom_call.1} parent=15 // pred_check_branch
        %299 = sbr.rel (%p297) target = $region36
      $region35: #{tpu_custom_call.1} parent=15 // pred_region
        %p300 = scmp.lt.s32.totalorder %s21, 3
        %s301 = scalar_select %p300, %s21, 3
        %s302 = smul.addr %s301, 32
        %s303 = smul.addr %s302, 8
        %s304 = scalar_lea.vmem %s4, %s303
      $region36: #{tpu_custom_call.1} parent=15 // pred_fallthru
        _
      // Predicated region
      $region37: #{tpu_custom_call.1} parent=15 // pred_check
        %p305 = pneg %p182
      $region38: #{tpu_custom_call.1} parent=15 // pred_check_branch
        %307 = sbr.rel (%p305) target = $region40
      $region39: #{tpu_custom_call.1} parent=15 // pred_region
        %p308 = scmp.lt.s32.totalorder %s21, 3
        %s309 = scalar_select %p308, %s21, 3
        %s310 = smul.addr %s309, 32
        %s311 = smul.addr %s310, 8
        %s312 = scalar_lea.vmem %s5, %s311
      $region40: #{tpu_custom_call.1} parent=15 // pred_fallthru
        _
      // Predicated region
      $region41: #{tpu_custom_call.1} parent=15 // pred_check
        %p313 = pneg %p210
      $region42: #{tpu_custom_call.1} parent=15 // pred_check_branch
        %315 = sbr.rel (%p313) target = $region44
      $region43: #{tpu_custom_call.1} parent=15 // pred_region
        %s316 = smul.u32 8, %s22
        %p317 = scmp.lt.s32.totalorder %s20, 1
        %s318 = scalar_select %p317, %s20, 1
        %p319 = scmp.lt.s32.totalorder %s316, 15
        %s320 = scalar_select %p319, %s316, 15
        %s321 = smul.addr %s318, 16
        %s322 = sadd.s32 %s320, %s321
        %s323 = smul.addr %s322, 8
        %s324 = scalar_lea.vmem %s6, %s323
        %s325 = smul.u32 8, %s22
      $region44: #{tpu_custom_call.1} parent=15 // pred_fallthru
        _
    $region16: #{tpu_custom_call.1} parent=5 // pred_fallthru
      _
    %p326 = scmp.le.s32.totalorder 1, %s13
    %p327 = scmp.lt.s32.totalorder %s13, 17
    %p328 = pnand %p326, %p327
    %p329 = pneg %p328
    // Predicated region
    $region45: #{tpu_custom_call.1} parent=5 // pred_check
      _
    $region46: #{tpu_custom_call.1} parent=5 // pred_check_branch
      %331 = sbr.rel (%p328) target = $region48
    $region47: #{tpu_custom_call.1} parent=5 // pred_region
      %s332 = ssub.s32 %s13, 1
      %p333 = scmp.lt.s32.totalorder %s23, 1
      %s334 = scalar_select %p333, %s23, 1
      %s335 = smul.addr %s334, 32
      %s336 = smul.addr %s335, 8
      %s337 = scalar_lea.vmem %s0, %s336
      %p338 = pneg %p58
      %p339 = pneg %p55
      %p340 = scmp.lt.s32.totalorder %s23, 1
      %s341 = scalar_select %p340, %s23, 1
      %s342 = smul.addr %s341, 16
      %s343 = smul.addr %s342, 8
      %s344 = scalar_lea.vmem %s1, %s343
      %p345 = pneg %p84
      %p346 = pneg %p81
      %p347 = scmp.lt.s32.totalorder %s23, 1
      %s348 = scalar_select %p347, %s23, 1
      %s349 = smul.addr %s348, 16
      %s350 = smul.addr %s349, 8
      %s351 = scalar_lea.vmem %s2, %s350
      %p352 = pneg %p110
      %p353 = pneg %p107
      %p354 = scmp.lt.s32.totalorder %s24, 3
      %s355 = scalar_select %p354, %s24, 3
      %s356 = smul.addr %s355, 32
      %s357 = smul.addr %s356, 8
      %s358 = scalar_lea.vmem %s3, %s357
      %p359 = pneg %p136
      %p360 = pneg %p133
      %p361 = scmp.lt.s32.totalorder %s24, 3
      %s362 = scalar_select %p361, %s24, 3
      %s363 = smul.addr %s362, 32
      %s364 = smul.addr %s363, 8
      %s365 = scalar_lea.vmem %s4, %s364
      %p366 = pneg %p162
      %p367 = pneg %p159
      %p368 = scmp.lt.s32.totalorder %s24, 3
      %s369 = scalar_select %p368, %s24, 3
      %s370 = smul.addr %s369, 32
      %s371 = smul.addr %s370, 8
      %s372 = scalar_lea.vmem %s5, %s371
      %p373 = pneg %p188
      %p374 = pneg %p185
      %s375 = smul.u32 8, %s25
      %p376 = scmp.lt.s32.totalorder %s23, 1
      %s377 = scalar_select %p376, %s23, 1
      %p378 = scmp.lt.s32.totalorder %s375, 15
      %s379 = scalar_select %p378, %s375, 15
      %s380 = smul.addr %s377, 16
      %s381 = sadd.s32 %s379, %s380
      %s382 = smul.addr %s381, 8
      %s383 = scalar_lea.vmem %s6, %s382
      %p384 = pneg %p216
      %p385 = pneg %p213
      %p386 = pneg %p246
      %p387 = pneg %p243
      %s388 = smul.u32 8, %s25
      %p389 = scmp.lt.s32.totalorder %s23, 1
      %s390 = scalar_select %p389, %s23, 1
      %p391 = scmp.lt.s32.totalorder %s24, 3
      %s392 = scalar_select %p391, %s24, 3
      %p393 = scmp.lt.s32.totalorder %s388, 15
      %s394 = scalar_select %p393, %s388, 15
      %s395 = smul.addr %s392, 16
      %s396 = sadd.s32 %s394, %s395
      %s397 = smul.addr %s390, 64
      %s398 = sadd.s32 %s396, %s397
      %s399 = smul.addr %s398, 8
      %s400 = scalar_lea.vmem %s7, %s399
      %p401 = scmp.lt.s32.totalorder %s23, 1
      %s402 = scalar_select %p401, %s23, 1
      %s403 = smul.addr %s402, 32
      %s404 = smul.addr %s403, 8
      %s405 = scalar_lea.vmem %s0, %s404
      %p406 = scmp.lt.s32.totalorder %s23, 1
      %s407 = scalar_select %p406, %s23, 1
      %s408 = smul.addr %s407, 16
      %s409 = smul.addr %s408, 8
      %s410 = scalar_lea.vmem %s1, %s409
      %p411 = scmp.lt.s32.totalorder %s23, 1
      %s412 = scalar_select %p411, %s23, 1
      %s413 = smul.addr %s412, 16
      %s414 = smul.addr %s413, 8
      %s415 = scalar_lea.vmem %s2, %s414
      %p416 = scmp.lt.s32.totalorder %s24, 3
      %s417 = scalar_select %p416, %s24, 3
      %s418 = smul.addr %s417, 32
      %s419 = smul.addr %s418, 8
      %s420 = scalar_lea.vmem %s3, %s419
      %p421 = scmp.lt.s32.totalorder %s24, 3
      %s422 = scalar_select %p421, %s24, 3
      %s423 = smul.addr %s422, 32
      %s424 = smul.addr %s423, 8
      %s425 = scalar_lea.vmem %s4, %s424
      %p426 = scmp.lt.s32.totalorder %s24, 3
      %s427 = scalar_select %p426, %s24, 3
      %s428 = smul.addr %s427, 32
      %s429 = smul.addr %s428, 8
      %s430 = scalar_lea.vmem %s5, %s429
      %s431 = smul.u32 8, %s25
      %p432 = scmp.lt.s32.totalorder %s23, 1
      %s433 = scalar_select %p432, %s23, 1
      %p434 = scmp.lt.s32.totalorder %s431, 15
      %s435 = scalar_select %p434, %s431, 15
      %s436 = smul.addr %s433, 16
      %s437 = sadd.s32 %s435, %s436
      %s438 = smul.addr %s437, 8
      %s439 = scalar_lea.vmem %s6, %s438
      %s440 = smul.u32 8, %s25
      %s441 = smul.u32 8, %s25
      %p442 = scmp.lt.s32.totalorder %s23, 1
      %s443 = scalar_select %p442, %s23, 1
      %p444 = scmp.lt.s32.totalorder %s24, 3
      %s445 = scalar_select %p444, %s24, 3
      %p446 = scmp.lt.s32.totalorder %s441, 15
      %s447 = scalar_select %p446, %s441, 15
      %s448 = smul.addr %s445, 16
      %s449 = sadd.s32 %s447, %s448
      %s450 = smul.addr %s443, 64
      %s451 = sadd.s32 %s449, %s450
      %s452 = smul.addr %s451, 8
      %s453 = scalar_lea.vmem %s7, %s452
      %s454 = smul.u32 8, %s25
      %s455 = smul.u32 %s25, 64
      %p456 = scmp.eq.s32.totalorder %s25, 0
      // Predicated region
      $region49: #{tpu_custom_call.1} parent=47 // pred_check
        %p457 = pneg %p456
      $region50: #{tpu_custom_call.1} parent=47 // pred_check_branch
        %459 = sbr.rel (%p457) target = $region52
      $region51: #{tpu_custom_call.1} parent=47 // pred_region
        %v460 = vld [vmem:[%s405] sm:$0xff]
        %v461 = vld [vmem:[%s405 + $0x8] sm:$0xff]
        %v462 = vld [vmem:[%s405 + $0x10] sm:$0xff]
        %v463 = vld [vmem:[%s405 + $0x18] sm:$0xff]
        %v464 = vld [vmem:[%s405 + $0x20] sm:$0xff]
        %v465 = vld [vmem:[%s405 + $0x28] sm:$0xff]
        %v466 = vld [vmem:[%s405 + $0x30] sm:$0xff]
        %v467 = vld [vmem:[%s405 + $0x38] sm:$0xff]
        %v468 = vld [vmem:[%s405 + $0x40] sm:$0xff]
        %v469 = vld [vmem:[%s405 + $0x48] sm:$0xff]
        %v470 = vld [vmem:[%s405 + $0x50] sm:$0xff]
        %v471 = vld [vmem:[%s405 + $0x58] sm:$0xff]
        %v472 = vld [vmem:[%s405 + $0x60] sm:$0xff]
        %v473 = vld [vmem:[%s405 + $0x68] sm:$0xff]
        %v474 = vld [vmem:[%s405 + $0x70] sm:$0xff]
        %v475 = vld [vmem:[%s405 + $0x78] sm:$0xff]
        %v476 = vld [vmem:[%s405 + $0x80] sm:$0xff]
        %v477 = vld [vmem:[%s405 + $0x88] sm:$0xff]
        %v478 = vld [vmem:[%s405 + $0x90] sm:$0xff]
        %v479 = vld [vmem:[%s405 + $0x98] sm:$0xff]
        %v480 = vld [vmem:[%s405 + $0xa0] sm:$0xff]
        %v481 = vld [vmem:[%s405 + $0xa8] sm:$0xff]
        %v482 = vld [vmem:[%s405 + $0xb0] sm:$0xff]
        %v483 = vld [vmem:[%s405 + $0xb8] sm:$0xff]
        %v484 = vld [vmem:[%s405 + $0xc0] sm:$0xff]
        %v485 = vld [vmem:[%s405 + $0xc8] sm:$0xff]
        %v486 = vld [vmem:[%s405 + $0xd0] sm:$0xff]
        %v487 = vld [vmem:[%s405 + $0xd8] sm:$0xff]
        %v488 = vld [vmem:[%s405 + $0xe0] sm:$0xff]
        %v489 = vld [vmem:[%s405 + $0xe8] sm:$0xff]
        %v490 = vld [vmem:[%s405 + $0xf0] sm:$0xff]
        %v491 = vld [vmem:[%s405 + $0xf8] sm:$0xff]
        %v492 = vld [vmem:[%s425] sm:$0xff]
        %v493 = vld [vmem:[%s425 + $0x8] sm:$0xff]
        %v494 = vld [vmem:[%s425 + $0x10] sm:$0xff]
        %v495 = vld [vmem:[%s425 + $0x18] sm:$0xff]
        %v496 = vld [vmem:[%s425 + $0x20] sm:$0xff]
        %v497 = vld [vmem:[%s425 + $0x28] sm:$0xff]
        %v498 = vld [vmem:[%s425 + $0x30] sm:$0xff]
        %v499 = vld [vmem:[%s425 + $0x38] sm:$0xff]
        %v500 = vld [vmem:[%s425 + $0x40] sm:$0xff]
        %v501 = vld [vmem:[%s425 + $0x48] sm:$0xff]
        %v502 = vld [vmem:[%s425 + $0x50] sm:$0xff]
        %v503 = vld [vmem:[%s425 + $0x58] sm:$0xff]
        %v504 = vld [vmem:[%s425 + $0x60] sm:$0xff]
        %v505 = vld [vmem:[%s425 + $0x68] sm:$0xff]
        %v506 = vld [vmem:[%s425 + $0x70] sm:$0xff]
        %v507 = vld [vmem:[%s425 + $0x78] sm:$0xff]
        %v508 = vld [vmem:[%s425 + $0x80] sm:$0xff]
        %v509 = vld [vmem:[%s425 + $0x88] sm:$0xff]
        %v510 = vld [vmem:[%s425 + $0x90] sm:$0xff]
        %v511 = vld [vmem:[%s425 + $0x98] sm:$0xff]
        %v512 = vld [vmem:[%s425 + $0xa0] sm:$0xff]
        %v513 = vld [vmem:[%s425 + $0xa8] sm:$0xff]
        %v514 = vld [vmem:[%s425 + $0xb0] sm:$0xff]
        %v515 = vld [vmem:[%s425 + $0xb8] sm:$0xff]
        %v516 = vld [vmem:[%s425 + $0xc0] sm:$0xff]
        %v517 = vld [vmem:[%s425 + $0xc8] sm:$0xff]
        %v518 = vld [vmem:[%s425 + $0xd0] sm:$0xff]
        %v519 = vld [vmem:[%s425 + $0xd8] sm:$0xff]
        %v520 = vld [vmem:[%s425 + $0xe0] sm:$0xff]
        %v521 = vld [vmem:[%s425 + $0xe8] sm:$0xff]
        %v522 = vld [vmem:[%s425 + $0xf0] sm:$0xff]
        %v523 = vld [vmem:[%s425 + $0xf8] sm:$0xff]
        %524 = vmatprep.subr.mxu0 0.0
        %525 = vmatpush1.msra.mxu0 %v507
        %526 = vmatprep.subr.mxu0 0.0
        %527 = vmatpush1.msra.mxu0 %v506
        %528 = vmatprep.subr.mxu0 0.0
        %529 = vmatpush1.msra.mxu0 %v505
        %530 = vmatprep.subr.mxu0 0.0
        %531 = vmatpush1.msra.mxu0 %v504
        %532 = vmatprep.subr.mxu0 0.0
        %533 = vmatpush1.msra.mxu0 %v503
        %534 = vmatprep.subr.mxu0 0.0
        %535 = vmatpush1.msra.mxu0 %v502
        %536 = vmatprep.subr.mxu0 0.0
        %537 = vmatpush1.msra.mxu0 %v501
        %538 = vmatprep.subr.mxu0 0.0
        %539 = vmatpush1.msra.mxu0 %v500
        %540 = vmatprep.subr.mxu0 0.0
        %541 = vmatpush1.msra.mxu0 %v499
        %542 = vmatprep.subr.mxu0 0.0
        %543 = vmatpush1.msra.mxu0 %v498
        %544 = vmatprep.subr.mxu0 0.0
        %545 = vmatpush1.msra.mxu0 %v497
        %546 = vmatprep.subr.mxu0 0.0
        %547 = vmatpush1.msra.mxu0 %v496
        %548 = vmatprep.subr.mxu0 0.0
        %549 = vmatpush1.msra.mxu0 %v495
        %550 = vmatprep.subr.mxu0 0.0
        %551 = vmatpush1.msra.mxu0 %v494
        %552 = vmatprep.subr.mxu0 0.0
        %553 = vmatpush1.msra.mxu0 %v493
        %554 = vmatprep.subr.mxu0 0.0
        %555 = vmatpush1.msra.mxu0 %v492
        %556 = vmatprep.subr.mxu0 0.0
        %557 = vmatpush2.msra.mxu0 %v523
        %558 = vmatprep.subr.mxu0 0.0
        %559 = vmatpush2.msra.mxu0 %v522
        %560 = vmatprep.subr.mxu0 0.0
        %561 = vmatpush2.msra.mxu0 %v521
        %562 = vmatprep.subr.mxu0 0.0
        %563 = vmatpush2.msra.mxu0 %v520
        %564 = vmatprep.subr.mxu0 0.0
        %565 = vmatpush2.msra.mxu0 %v519
        %566 = vmatprep.subr.mxu0 0.0
        %567 = vmatpush2.msra.mxu0 %v518
        %568 = vmatprep.subr.mxu0 0.0
        %569 = vmatpush2.msra.mxu0 %v517
        %570 = vmatprep.subr.mxu0 0.0
        %571 = vmatpush2.msra.mxu0 %v516
        %572 = vmatprep.subr.mxu0 0.0
        %573 = vmatpush2.msra.mxu0 %v515
        %574 = vmatprep.subr.mxu0 0.0
        %575 = vmatpush2.msra.mxu0 %v514
        %576 = vmatprep.subr.mxu0 0.0
        %577 = vmatpush2.msra.mxu0 %v513
        %578 = vmatprep.subr.mxu0 0.0
        %579 = vmatpush2.msra.mxu0 %v512
        %580 = vmatprep.subr.mxu0 0.0
        %581 = vmatpush2.msra.mxu0 %v511
        %582 = vmatprep.subr.mxu0 0.0
        %583 = vmatpush2.msra.mxu0 %v510
        %584 = vmatprep.subr.mxu0 0.0
        %585 = vmatpush2.msra.mxu0 %v509
        %586 = vmatprep.subr.mxu0 0.0
        %587 = vmatpush2.msra.mxu0 %v508
        %588 = vmatprep.mubr.f32.mxu0 %v461
        %589 = vmatmul.mubr.f32.gmra.mxu0 %v460
        %v590 = vpop.f32.mrf.mxu0
        %v591 = vadd.f32 0.0, %v590
        %v592 = vpop.f32.mrf.mxu0
        %593 = vmatprep.mubr.f32.mxu0 %v463
        %594 = vmatmul.mubr.f32.gmra.mxu0 %v462
        %v595 = vpop.f32.mrf.mxu0
        %v596 = vadd.f32 0.0, %v595
        %v597 = vpop.f32.mrf.mxu0
        %598 = vmatprep.mubr.f32.mxu0 %v465
        %599 = vmatmul.mubr.f32.gmra.mxu0 %v464
        %v600 = vpop.f32.mrf.mxu0
        %v601 = vadd.f32 0.0, %v600
        %v602 = vpop.f32.mrf.mxu0
        %603 = vmatprep.mubr.f32.mxu0 %v467
        %604 = vmatmul.mubr.f32.gmra.mxu0 %v466
        %v605 = vpop.f32.mrf.mxu0
        %v606 = vadd.f32 0.0, %v605
        %v607 = vpop.f32.mrf.mxu0
        %608 = vmatprep.mubr.f32.mxu0 %v469
        %609 = vmatmul.mubr.f32.gmra.mxu0 %v468
        %v610 = vpop.f32.mrf.mxu0
        %v611 = vadd.f32 0.0, %v610
        %v612 = vpop.f32.mrf.mxu0
        %613 = vmatprep.mubr.f32.mxu0 %v471
        %614 = vmatmul.mubr.f32.gmra.mxu0 %v470
        %v615 = vpop.f32.mrf.mxu0
        %v616 = vadd.f32 0.0, %v615
        %v617 = vpop.f32.mrf.mxu0
        %618 = vmatprep.mubr.f32.mxu0 %v473
        %619 = vmatmul.mubr.f32.gmra.mxu0 %v472
        %v620 = vpop.f32.mrf.mxu0
        %v621 = vadd.f32 0.0, %v620
        %v622 = vpop.f32.mrf.mxu0
        %623 = vmatprep.mubr.f32.mxu0 %v475
        %624 = vmatmul.mubr.f32.gmra.mxu0 %v474
        %v625 = vpop.f32.mrf.mxu0
        %v626 = vadd.f32 0.0, %v625
        %v627 = vpop.f32.mrf.mxu0
        %628 = vmatprep.mubr.f32.mxu0 %v477
        %629 = vmatmul.mubr.f32.gmra.mxu0 %v476
        %v630 = vpop.f32.mrf.mxu0
        %v631 = vadd.f32 0.0, %v630
        %v632 = vpop.f32.mrf.mxu0
        %633 = vmatprep.mubr.f32.mxu0 %v479
        %634 = vmatmul.mubr.f32.gmra.mxu0 %v478
        %v635 = vpop.f32.mrf.mxu0
        %v636 = vadd.f32 0.0, %v635
        %v637 = vpop.f32.mrf.mxu0
        %638 = vmatprep.mubr.f32.mxu0 %v481
        %639 = vmatmul.mubr.f32.gmra.mxu0 %v480
        %v640 = vpop.f32.mrf.mxu0
        %v641 = vadd.f32 0.0, %v640
        %v642 = vpop.f32.mrf.mxu0
        %643 = vmatprep.mubr.f32.mxu0 %v483
        %644 = vmatmul.mubr.f32.gmra.mxu0 %v482
        %v645 = vpop.f32.mrf.mxu0
        %v646 = vadd.f32 0.0, %v645
        %v647 = vpop.f32.mrf.mxu0
        %648 = vmatprep.mubr.f32.mxu0 %v485
        %649 = vmatmul.mubr.f32.gmra.mxu0 %v484
        %v650 = vpop.f32.mrf.mxu0
        %v651 = vadd.f32 0.0, %v650
        %v652 = vpop.f32.mrf.mxu0
        %653 = vmatprep.mubr.f32.mxu0 %v487
        %654 = vmatmul.mubr.f32.gmra.mxu0 %v486
        %v655 = vpop.f32.mrf.mxu0
        %v656 = vadd.f32 0.0, %v655
        %v657 = vpop.f32.mrf.mxu0
        %658 = vmatprep.mubr.f32.mxu0 %v489
        %659 = vmatmul.mubr.f32.gmra.mxu0 %v488
        %v660 = vpop.f32.mrf.mxu0
        %v661 = vadd.f32 0.0, %v660
        %v662 = vpop.f32.mrf.mxu0
        %663 = vmatprep.mubr.f32.mxu0 %v491
        %664 = vmatmul.mubr.f32.gmra.mxu0 %v490
        %v665 = vpop.f32.mrf.mxu0
        %v666 = vadd.f32 0.0, %v665
        %v667 = vpop.f32.mrf.mxu0
        %668 = vdwg.mxu0
        %v669 = vld [vmem:[%s430] sm:$0xff]
        %v670 = vld [vmem:[%s430 + $0x8] sm:$0xff]
        %v671 = vld [vmem:[%s430 + $0x10] sm:$0xff]
        %v672 = vld [vmem:[%s430 + $0x18] sm:$0xff]
        %v673 = vld [vmem:[%s430 + $0x20] sm:$0xff]
        %v674 = vld [vmem:[%s430 + $0x28] sm:$0xff]
        %v675 = vld [vmem:[%s430 + $0x30] sm:$0xff]
        %v676 = vld [vmem:[%s430 + $0x38] sm:$0xff]
        %v677 = vld [vmem:[%s430 + $0x40] sm:$0xff]
        %v678 = vld [vmem:[%s430 + $0x48] sm:$0xff]
        %v679 = vld [vmem:[%s430 + $0x50] sm:$0xff]
        %v680 = vld [vmem:[%s430 + $0x58] sm:$0xff]
        %v681 = vld [vmem:[%s430 + $0x60] sm:$0xff]
        %v682 = vld [vmem:[%s430 + $0x68] sm:$0xff]
        %v683 = vld [vmem:[%s430 + $0x70] sm:$0xff]
        %v684 = vld [vmem:[%s430 + $0x78] sm:$0xff]
        %v685 = vld [vmem:[%s430 + $0x80] sm:$0xff]
        %v686 = vld [vmem:[%s430 + $0x88] sm:$0xff]
        %v687 = vld [vmem:[%s430 + $0x90] sm:$0xff]
        %v688 = vld [vmem:[%s430 + $0x98] sm:$0xff]
        %v689 = vld [vmem:[%s430 + $0xa0] sm:$0xff]
        %v690 = vld [vmem:[%s430 + $0xa8] sm:$0xff]
        %v691 = vld [vmem:[%s430 + $0xb0] sm:$0xff]
        %v692 = vld [vmem:[%s430 + $0xb8] sm:$0xff]
        %v693 = vld [vmem:[%s430 + $0xc0] sm:$0xff]
        %v694 = vld [vmem:[%s430 + $0xc8] sm:$0xff]
        %v695 = vld [vmem:[%s430 + $0xd0] sm:$0xff]
        %v696 = vld [vmem:[%s430 + $0xd8] sm:$0xff]
        %v697 = vld [vmem:[%s430 + $0xe0] sm:$0xff]
        %v698 = vld [vmem:[%s430 + $0xe8] sm:$0xff]
        %v699 = vld [vmem:[%s430 + $0xf0] sm:$0xff]
        %v700 = vld [vmem:[%s430 + $0xf8] sm:$0xff]
        %701 = vmatprep.subr.mxu0 0.0
        %702 = vmatpush1.msra.mxu0 %v684
        %703 = vmatprep.subr.mxu0 0.0
        %704 = vmatpush1.msra.mxu0 %v683
        %705 = vmatprep.subr.mxu0 0.0
        %706 = vmatpush1.msra.mxu0 %v682
        %707 = vmatprep.subr.mxu0 0.0
        %708 = vmatpush1.msra.mxu0 %v681
        %709 = vmatprep.subr.mxu0 0.0
        %710 = vmatpush1.msra.mxu0 %v680
        %711 = vmatprep.subr.mxu0 0.0
        %712 = vmatpush1.msra.mxu0 %v679
        %713 = vmatprep.subr.mxu0 0.0
        %714 = vmatpush1.msra.mxu0 %v678
        %715 = vmatprep.subr.mxu0 0.0
        %716 = vmatpush1.msra.mxu0 %v677
        %717 = vmatprep.subr.mxu0 0.0
        %718 = vmatpush1.msra.mxu0 %v676
        %719 = vmatprep.subr.mxu0 0.0
        %720 = vmatpush1.msra.mxu0 %v675
        %721 = vmatprep.subr.mxu0 0.0
        %722 = vmatpush1.msra.mxu0 %v674
        %723 = vmatprep.subr.mxu0 0.0
        %724 = vmatpush1.msra.mxu0 %v673
        %725 = vmatprep.subr.mxu0 0.0
        %726 = vmatpush1.msra.mxu0 %v672
        %727 = vmatprep.subr.mxu0 0.0
        %728 = vmatpush1.msra.mxu0 %v671
        %729 = vmatprep.subr.mxu0 0.0
        %730 = vmatpush1.msra.mxu0 %v670
        %731 = vmatprep.subr.mxu0 0.0
        %732 = vmatpush1.msra.mxu0 %v669
        %733 = vmatprep.subr.mxu0 0.0
        %734 = vmatpush2.msra.mxu0 %v700
        %735 = vmatprep.subr.mxu0 0.0
        %736 = vmatpush2.msra.mxu0 %v699
        %737 = vmatprep.subr.mxu0 0.0
        %738 = vmatpush2.msra.mxu0 %v698
        %739 = vmatprep.subr.mxu0 0.0
        %740 = vmatpush2.msra.mxu0 %v697
        %741 = vmatprep.subr.mxu0 0.0
        %742 = vmatpush2.msra.mxu0 %v696
        %743 = vmatprep.subr.mxu0 0.0
        %744 = vmatpush2.msra.mxu0 %v695
        %745 = vmatprep.subr.mxu0 0.0
        %746 = vmatpush2.msra.mxu0 %v694
        %747 = vmatprep.subr.mxu0 0.0
        %748 = vmatpush2.msra.mxu0 %v693
        %749 = vmatprep.subr.mxu0 0.0
        %750 = vmatpush2.msra.mxu0 %v692
        %751 = vmatprep.subr.mxu0 0.0
        %752 = vmatpush2.msra.mxu0 %v691
        %753 = vmatprep.subr.mxu0 0.0
        %754 = vmatpush2.msra.mxu0 %v690
        %755 = vmatprep.subr.mxu0 0.0
        %756 = vmatpush2.msra.mxu0 %v689
        %757 = vmatprep.subr.mxu0 0.0
        %758 = vmatpush2.msra.mxu0 %v688
        %759 = vmatprep.subr.mxu0 0.0
        %760 = vmatpush2.msra.mxu0 %v687
        %761 = vmatprep.subr.mxu0 0.0
        %762 = vmatpush2.msra.mxu0 %v686
        %763 = vmatprep.subr.mxu0 0.0
        %764 = vmatpush2.msra.mxu0 %v685
        %765 = vmatprep.mubr.f32.mxu0 %v461
        %766 = vmatmul.mubr.f32.gmra.mxu0 %v460
        %v767 = vpop.f32.mrf.mxu0
        %v768 = vadd.f32 0.0, %v767
        %v769 = vpop.f32.mrf.mxu0
        %770 = vmatprep.mubr.f32.mxu0 %v463
        %771 = vmatmul.mubr.f32.gmra.mxu0 %v462
        %v772 = vpop.f32.mrf.mxu0
        %v773 = vadd.f32 0.0, %v772
        %v774 = vpop.f32.mrf.mxu0
        %775 = vmatprep.mubr.f32.mxu0 %v465
        %776 = vmatmul.mubr.f32.gmra.mxu0 %v464
        %v777 = vpop.f32.mrf.mxu0
        %v778 = vadd.f32 0.0, %v777
        %v779 = vpop.f32.mrf.mxu0
        %780 = vmatprep.mubr.f32.mxu0 %v467
        %781 = vmatmul.mubr.f32.gmra.mxu0 %v466
        %v782 = vpop.f32.mrf.mxu0
        %v783 = vadd.f32 0.0, %v782
        %v784 = vpop.f32.mrf.mxu0
        %785 = vmatprep.mubr.f32.mxu0 %v469
        %786 = vmatmul.mubr.f32.gmra.mxu0 %v468
        %v787 = vpop.f32.mrf.mxu0
        %v788 = vadd.f32 0.0, %v787
        %v789 = vpop.f32.mrf.mxu0
        %790 = vmatprep.mubr.f32.mxu0 %v471
        %791 = vmatmul.mubr.f32.gmra.mxu0 %v470
        %v792 = vpop.f32.mrf.mxu0
        %v793 = vadd.f32 0.0, %v792
        %v794 = vpop.f32.mrf.mxu0
        %795 = vmatprep.mubr.f32.mxu0 %v473
        %796 = vmatmul.mubr.f32.gmra.mxu0 %v472
        %v797 = vpop.f32.mrf.mxu0
        %v798 = vadd.f32 0.0, %v797
        %v799 = vpop.f32.mrf.mxu0
        %800 = vmatprep.mubr.f32.mxu0 %v475
        %801 = vmatmul.mubr.f32.gmra.mxu0 %v474
        %v802 = vpop.f32.mrf.mxu0
        %v803 = vadd.f32 0.0, %v802
        %v804 = vpop.f32.mrf.mxu0
        %805 = vmatprep.mubr.f32.mxu0 %v477
        %806 = vmatmul.mubr.f32.gmra.mxu0 %v476
        %v807 = vpop.f32.mrf.mxu0
        %v808 = vadd.f32 0.0, %v807
        %v809 = vpop.f32.mrf.mxu0
        %810 = vmatprep.mubr.f32.mxu0 %v479
        %811 = vmatmul.mubr.f32.gmra.mxu0 %v478
        %v812 = vpop.f32.mrf.mxu0
        %v813 = vadd.f32 0.0, %v812
        %v814 = vpop.f32.mrf.mxu0
        %815 = vmatprep.mubr.f32.mxu0 %v481
        %816 = vmatmul.mubr.f32.gmra.mxu0 %v480
        %v817 = vpop.f32.mrf.mxu0
        %v818 = vadd.f32 0.0, %v817
        %v819 = vpop.f32.mrf.mxu0
        %820 = vmatprep.mubr.f32.mxu0 %v483
        %821 = vmatmul.mubr.f32.gmra.mxu0 %v482
        %v822 = vpop.f32.mrf.mxu0
        %v823 = vadd.f32 0.0, %v822
        %v824 = vpop.f32.mrf.mxu0
        %825 = vmatprep.mubr.f32.mxu0 %v485
        %826 = vmatmul.mubr.f32.gmra.mxu0 %v484
        %v827 = vpop.f32.mrf.mxu0
        %v828 = vadd.f32 0.0, %v827
        %v829 = vpop.f32.mrf.mxu0
        %830 = vmatprep.mubr.f32.mxu0 %v487
        %831 = vmatmul.mubr.f32.gmra.mxu0 %v486
        %v832 = vpop.f32.mrf.mxu0
        %v833 = vadd.f32 0.0, %v832
        %v834 = vpop.f32.mrf.mxu0
        %835 = vmatprep.mubr.f32.mxu0 %v489
        %836 = vmatmul.mubr.f32.gmra.mxu0 %v488
        %v837 = vpop.f32.mrf.mxu0
        %v838 = vadd.f32 0.0, %v837
        %v839 = vpop.f32.mrf.mxu0
        %840 = vmatprep.mubr.f32.mxu0 %v491
        %841 = vmatmul.mubr.f32.gmra.mxu0 %v490
        %v842 = vpop.f32.mrf.mxu0
        %v843 = vadd.f32 0.0, %v842
        %v844 = vpop.f32.mrf.mxu0
        %845 = vdwg.mxu0
        %v846 = vld [vmem:[%s410] sm:$0xff]
        %v847 = vld [vmem:[%s410 + $0x8] sm:$0xff]
        %v848 = vld [vmem:[%s410 + $0x10] sm:$0xff]
        %v849 = vld [vmem:[%s410 + $0x18] sm:$0xff]
        %v850 = vld [vmem:[%s410 + $0x20] sm:$0xff]
        %v851 = vld [vmem:[%s410 + $0x28] sm:$0xff]
        %v852 = vld [vmem:[%s410 + $0x30] sm:$0xff]
        %v853 = vld [vmem:[%s410 + $0x38] sm:$0xff]
        %v854 = vld [vmem:[%s410 + $0x40] sm:$0xff]
        %v855 = vld [vmem:[%s410 + $0x48] sm:$0xff]
        %v856 = vld [vmem:[%s410 + $0x50] sm:$0xff]
        %v857 = vld [vmem:[%s410 + $0x58] sm:$0xff]
        %v858 = vld [vmem:[%s410 + $0x60] sm:$0xff]
        %v859 = vld [vmem:[%s410 + $0x68] sm:$0xff]
        %v860 = vld [vmem:[%s410 + $0x70] sm:$0xff]
        %v861 = vld [vmem:[%s410 + $0x78] sm:$0xff]
        %v862 = vld [vmem:[%s415] sm:$0xff]
        %v863 = vld [vmem:[%s415 + $0x8] sm:$0xff]
        %v864 = vld [vmem:[%s415 + $0x10] sm:$0xff]
        %v865 = vld [vmem:[%s415 + $0x18] sm:$0xff]
        %v866 = vld [vmem:[%s415 + $0x20] sm:$0xff]
        %v867 = vld [vmem:[%s415 + $0x28] sm:$0xff]
        %v868 = vld [vmem:[%s415 + $0x30] sm:$0xff]
        %v869 = vld [vmem:[%s415 + $0x38] sm:$0xff]
        %v870 = vld [vmem:[%s415 + $0x40] sm:$0xff]
        %v871 = vld [vmem:[%s415 + $0x48] sm:$0xff]
        %v872 = vld [vmem:[%s415 + $0x50] sm:$0xff]
        %v873 = vld [vmem:[%s415 + $0x58] sm:$0xff]
        %v874 = vld [vmem:[%s415 + $0x60] sm:$0xff]
        %v875 = vld [vmem:[%s415 + $0x68] sm:$0xff]
        %v876 = vld [vmem:[%s415 + $0x70] sm:$0xff]
        %v877 = vld [vmem:[%s415 + $0x78] sm:$0xff]
        %v878 = vmul.f32 %v591, %v846
        %v879 = vmul.f32 %v596, %v847
        %v880 = vmul.f32 %v601, %v848
        %v881 = vmul.f32 %v606, %v849
        %v882 = vmul.f32 %v611, %v850
        %v883 = vmul.f32 %v616, %v851
        %v884 = vmul.f32 %v621, %v852
        %v885 = vmul.f32 %v626, %v853
        %v886 = vmul.f32 %v631, %v854
        %v887 = vmul.f32 %v636, %v855
        %v888 = vmul.f32 %v641, %v856
        %v889 = vmul.f32 %v646, %v857
        %v890 = vmul.f32 %v651, %v858
        %v891 = vmul.f32 %v656, %v859
        %v892 = vmul.f32 %v661, %v860
        %v893 = vmul.f32 %v666, %v861
        %910 = vrot.lane.b32.xlu0 %v591, 96
        %v911 = vpop.permute.xlu0 %910
        %912 = vrot.lane.b32.xlu0 %v596, 96
        %v913 = vpop.permute.xlu0 %912
        %914 = vrot.lane.b32.xlu0 %v601, 96
        %v915 = vpop.permute.xlu0 %914
        %916 = vrot.lane.b32.xlu0 %v606, 96
        %v917 = vpop.permute.xlu0 %916
        %918 = vrot.lane.b32.xlu0 %v611, 96
        %v919 = vpop.permute.xlu0 %918
        %920 = vrot.lane.b32.xlu0 %v616, 96
        %v921 = vpop.permute.xlu0 %920
        %922 = vrot.lane.b32.xlu0 %v621, 96
        %v923 = vpop.permute.xlu0 %922
        %924 = vrot.lane.b32.xlu0 %v626, 96
        %v925 = vpop.permute.xlu0 %924
        %926 = vrot.lane.b32.xlu0 %v631, 96
        %v927 = vpop.permute.xlu0 %926
        %928 = vrot.lane.b32.xlu0 %v636, 96
        %v929 = vpop.permute.xlu0 %928
        %930 = vrot.lane.b32.xlu0 %v641, 96
        %v931 = vpop.permute.xlu0 %930
        %932 = vrot.lane.b32.xlu0 %v646, 96
        %v933 = vpop.permute.xlu0 %932
        %934 = vrot.lane.b32.xlu0 %v651, 96
        %v935 = vpop.permute.xlu0 %934
        %936 = vrot.lane.b32.xlu0 %v656, 96
        %v937 = vpop.permute.xlu0 %936
        %938 = vrot.lane.b32.xlu0 %v661, 96
        %v939 = vpop.permute.xlu0 %938
        %940 = vrot.lane.b32.xlu0 %v666, 96
        %v941 = vpop.permute.xlu0 %940
        %958 = vrot.lane.b32.xlu0 %v591, 32
        %v959 = vpop.permute.xlu0 %958
        %960 = vrot.lane.b32.xlu0 %v596, 32
        %v961 = vpop.permute.xlu0 %960
        %962 = vrot.lane.b32.xlu0 %v601, 32
        %v963 = vpop.permute.xlu0 %962
        %964 = vrot.lane.b32.xlu0 %v606, 32
        %v965 = vpop.permute.xlu0 %964
        %966 = vrot.lane.b32.xlu0 %v611, 32
        %v967 = vpop.permute.xlu0 %966
        %968 = vrot.lane.b32.xlu0 %v616, 32
        %v969 = vpop.permute.xlu0 %968
        %970 = vrot.lane.b32.xlu0 %v621, 32
        %v971 = vpop.permute.xlu0 %970
        %972 = vrot.lane.b32.xlu0 %v626, 32
        %v973 = vpop.permute.xlu0 %972
        %974 = vrot.lane.b32.xlu0 %v631, 32
        %v975 = vpop.permute.xlu0 %974
        %976 = vrot.lane.b32.xlu0 %v636, 32
        %v977 = vpop.permute.xlu0 %976
        %978 = vrot.lane.b32.xlu0 %v641, 32
        %v979 = vpop.permute.xlu0 %978
        %980 = vrot.lane.b32.xlu0 %v646, 32
        %v981 = vpop.permute.xlu0 %980
        %982 = vrot.lane.b32.xlu0 %v651, 32
        %v983 = vpop.permute.xlu0 %982
        %984 = vrot.lane.b32.xlu0 %v656, 32
        %v985 = vpop.permute.xlu0 %984
        %986 = vrot.lane.b32.xlu0 %v661, 32
        %v987 = vpop.permute.xlu0 %986
        %988 = vrot.lane.b32.xlu0 %v666, 32
        %v989 = vpop.permute.xlu0 %988
        %vm1006 = vcmask 261120
        %v1007 = vsel %vm1006, %v911, %v959
        %v1008 = vsel %vm1006, %v913, %v961
        %v1009 = vsel %vm1006, %v915, %v963
        %v1010 = vsel %vm1006, %v917, %v965
        %v1011 = vsel %vm1006, %v919, %v967
        %v1012 = vsel %vm1006, %v921, %v969
        %v1013 = vsel %vm1006, %v923, %v971
        %v1014 = vsel %vm1006, %v925, %v973
        %v1015 = vsel %vm1006, %v927, %v975
        %v1016 = vsel %vm1006, %v929, %v977
        %v1017 = vsel %vm1006, %v931, %v979
        %v1018 = vsel %vm1006, %v933, %v981
        %v1019 = vsel %vm1006, %v935, %v983
        %v1020 = vsel %vm1006, %v937, %v985
        %v1021 = vsel %vm1006, %v939, %v987
        %v1022 = vsel %vm1006, %v941, %v989
        %v1023 = vmul.f32 %v1007, %v862
        %v1024 = vmul.f32 %v1008, %v863
        %v1025 = vmul.f32 %v1009, %v864
        %v1026 = vmul.f32 %v1010, %v865
        %v1027 = vmul.f32 %v1011, %v866
        %v1028 = vmul.f32 %v1012, %v867
        %v1029 = vmul.f32 %v1013, %v868
        %v1030 = vmul.f32 %v1014, %v869
        %v1031 = vmul.f32 %v1015, %v870
        %v1032 = vmul.f32 %v1016, %v871
        %v1033 = vmul.f32 %v1017, %v872
        %v1034 = vmul.f32 %v1018, %v873
        %v1035 = vmul.f32 %v1019, %v874
        %v1036 = vmul.f32 %v1020, %v875
        %v1037 = vmul.f32 %v1021, %v876
        %v1038 = vmul.f32 %v1022, %v877
        %v1039 = vadd.f32 %v878, %v1023
        %v1040 = vadd.f32 %v879, %v1024
        %v1041 = vadd.f32 %v880, %v1025
        %v1042 = vadd.f32 %v881, %v1026
        %v1043 = vadd.f32 %v882, %v1027
        %v1044 = vadd.f32 %v883, %v1028
        %v1045 = vadd.f32 %v884, %v1029
        %v1046 = vadd.f32 %v885, %v1030
        %v1047 = vadd.f32 %v886, %v1031
        %v1048 = vadd.f32 %v887, %v1032
        %v1049 = vadd.f32 %v888, %v1033
        %v1050 = vadd.f32 %v889, %v1034
        %v1051 = vadd.f32 %v890, %v1035
        %v1052 = vadd.f32 %v891, %v1036
        %v1053 = vadd.f32 %v892, %v1037
        %v1054 = vadd.f32 %v893, %v1038
        %1055 = vxpose.xlu0.b32.start [1/16] %v1039, 128
        %1056 = vxpose.xlu0.b32.cont [2/16] %v1040, 128
        %1057 = vxpose.xlu0.b32.cont [3/16] %v1041, 128
        %1058 = vxpose.xlu0.b32.cont [4/16] %v1042, 128
        %1059 = vxpose.xlu0.b32.cont [5/16] %v1043, 128
        %1060 = vxpose.xlu0.b32.cont [6/16] %v1044, 128
        %1061 = vxpose.xlu0.b32.cont [7/16] %v1045, 128
        %1062 = vxpose.xlu0.b32.cont [8/16] %v1046, 128
        %1063 = vxpose.xlu0.b32.cont [9/16] %v1047, 128
        %1064 = vxpose.xlu0.b32.cont [10/16] %v1048, 128
        %1065 = vxpose.xlu0.b32.cont [11/16] %v1049, 128
        %1066 = vxpose.xlu0.b32.cont [12/16] %v1050, 128
        %1067 = vxpose.xlu0.b32.cont [13/16] %v1051, 128
        %1068 = vxpose.xlu0.b32.cont [14/16] %v1052, 128
        %1069 = vxpose.xlu0.b32.cont [15/16] %v1053, 128
        %1070 = vxpose.xlu0.b32.end [16/16] %v1054, 128
        %v1071 = vpop.trf.xlu0
        %v1072 = vpop.trf.xlu0
        %v1073 = vpop.trf.xlu0
        %v1074 = vpop.trf.xlu0
        %v1075 = vpop.trf.xlu0
        %v1076 = vpop.trf.xlu0
        %v1077 = vpop.trf.xlu0
        %v1078 = vpop.trf.xlu0
        %v1079 = vpop.trf.xlu0
        %v1080 = vpop.trf.xlu0
        %v1081 = vpop.trf.xlu0
        %v1082 = vpop.trf.xlu0
        %v1083 = vpop.trf.xlu0
        %v1084 = vpop.trf.xlu0
        %v1085 = vpop.trf.xlu0
        %v1086 = vpop.trf.xlu0
        %1087 = vst [vmem:[#allocation2] sm:$0xff] %v1071
        %1088 = vst [vmem:[#allocation2 + $0x8] sm:$0xff] %v1072
        %1089 = vst [vmem:[#allocation2 + $0x10] sm:$0xff] %v1073
        %1090 = vst [vmem:[#allocation2 + $0x18] sm:$0xff] %v1074
        %1091 = vst [vmem:[#allocation2 + $0x20] sm:$0xff] %v1075
        %1092 = vst [vmem:[#allocation2 + $0x28] sm:$0xff] %v1076
        %1093 = vst [vmem:[#allocation2 + $0x30] sm:$0xff] %v1077
        %1094 = vst [vmem:[#allocation2 + $0x38] sm:$0xff] %v1078
        %vm1095 = vcmask 523264
        %1096 = vst.msk [vmem:[#allocation3] sm:$0xff] %vm1095, %v768
        %1097 = vst.msk [vmem:[#allocation3 + $0x8] sm:$0xff] %vm1095, %v773
        %1098 = vst.msk [vmem:[#allocation3 + $0x10] sm:$0xff] %vm1095, %v778
        %1099 = vst.msk [vmem:[#allocation3 + $0x18] sm:$0xff] %vm1095, %v783
        %1100 = vst.msk [vmem:[#allocation3 + $0x20] sm:$0xff] %vm1095, %v788
        %1101 = vst.msk [vmem:[#allocation3 + $0x28] sm:$0xff] %vm1095, %v793
        %1102 = vst.msk [vmem:[#allocation3 + $0x30] sm:$0xff] %vm1095, %v798
        %1103 = vst.msk [vmem:[#allocation3 + $0x38] sm:$0xff] %vm1095, %v803
        %1104 = vst.msk [vmem:[#allocation3 + $0x40] sm:$0xff] %vm1095, %v808
        %1105 = vst.msk [vmem:[#allocation3 + $0x48] sm:$0xff] %vm1095, %v813
        %1106 = vst.msk [vmem:[#allocation3 + $0x50] sm:$0xff] %vm1095, %v818
        %1107 = vst.msk [vmem:[#allocation3 + $0x58] sm:$0xff] %vm1095, %v823
        %1108 = vst.msk [vmem:[#allocation3 + $0x60] sm:$0xff] %vm1095, %v828
        %1109 = vst.msk [vmem:[#allocation3 + $0x68] sm:$0xff] %vm1095, %v833
        %1110 = vst.msk [vmem:[#allocation3 + $0x70] sm:$0xff] %vm1095, %v838
        %1111 = vst.msk [vmem:[#allocation3 + $0x78] sm:$0xff] %vm1095, %v843
      $region52: #{tpu_custom_call.1} parent=47 // pred_fallthru
        _
      %s1112 = sshra.s32 %s455, 3
      %s1113 = sand.u32 %s455, 7
      %s1114 = smul.u32 %s1112, 2
      %s1115 = smul.addr %s1114, 8
      %s1116 = scalar_lea.vmem %s405, %s1115
      %v1117 = vld [vmem:[%s1116] sm:$0xff]
      %v1118 = vld [vmem:[%s1116 + $0x8] sm:$0xff]
      %v1119 = vld [vmem:[%s1116 + $0x10] sm:$0xff]
      %v1120 = vld [vmem:[%s1116 + $0x18] sm:$0xff]
      %v1121 = vld [vmem:[%s1116 + $0x20] sm:$0xff]
      %v1122 = vld [vmem:[%s1116 + $0x28] sm:$0xff]
      %v1123 = vld [vmem:[%s1116 + $0x30] sm:$0xff]
      %v1124 = vld [vmem:[%s1116 + $0x38] sm:$0xff]
      %v1125 = vld [vmem:[%s1116 + $0x40] sm:$0xff]
      %v1126 = vld [vmem:[%s1116 + $0x48] sm:$0xff]
      %v1127 = vld [vmem:[%s1116 + $0x50] sm:$0xff]
      %v1128 = vld [vmem:[%s1116 + $0x58] sm:$0xff]
      %v1129 = vld [vmem:[%s1116 + $0x60] sm:$0xff]
      %v1130 = vld [vmem:[%s1116 + $0x68] sm:$0xff]
      %v1131 = vld [vmem:[%s1116 + $0x70] sm:$0xff]
      %v1132 = vld [vmem:[%s1116 + $0x78] sm:$0xff]
      %v1133 = vld [vmem:[%s420] sm:$0xff]
      %v1134 = vld [vmem:[%s420 + $0x8] sm:$0xff]
      %v1135 = vld [vmem:[%s420 + $0x10] sm:$0xff]
      %v1136 = vld [vmem:[%s420 + $0x18] sm:$0xff]
      %v1137 = vld [vmem:[%s420 + $0x20] sm:$0xff]
      %v1138 = vld [vmem:[%s420 + $0x28] sm:$0xff]
      %v1139 = vld [vmem:[%s420 + $0x30] sm:$0xff]
      %v1140 = vld [vmem:[%s420 + $0x38] sm:$0xff]
      %v1141 = vld [vmem:[%s420 + $0x40] sm:$0xff]
      %v1142 = vld [vmem:[%s420 + $0x48] sm:$0xff]
      %v1143 = vld [vmem:[%s420 + $0x50] sm:$0xff]
      %v1144 = vld [vmem:[%s420 + $0x58] sm:$0xff]
      %v1145 = vld [vmem:[%s420 + $0x60] sm:$0xff]
      %v1146 = vld [vmem:[%s420 + $0x68] sm:$0xff]
      %v1147 = vld [vmem:[%s420 + $0x70] sm:$0xff]
      %v1148 = vld [vmem:[%s420 + $0x78] sm:$0xff]
      %v1149 = vld [vmem:[%s420 + $0x80] sm:$0xff]
      %v1150 = vld [vmem:[%s420 + $0x88] sm:$0xff]
      %v1151 = vld [vmem:[%s420 + $0x90] sm:$0xff]
      %v1152 = vld [vmem:[%s420 + $0x98] sm:$0xff]
      %v1153 = vld [vmem:[%s420 + $0xa0] sm:$0xff]
      %v1154 = vld [vmem:[%s420 + $0xa8] sm:$0xff]
      %v1155 = vld [vmem:[%s420 + $0xb0] sm:$0xff]
      %v1156 = vld [vmem:[%s420 + $0xb8] sm:$0xff]
      %v1157 = vld [vmem:[%s420 + $0xc0] sm:$0xff]
      %v1158 = vld [vmem:[%s420 + $0xc8] sm:$0xff]
      %v1159 = vld [vmem:[%s420 + $0xd0] sm:$0xff]
      %v1160 = vld [vmem:[%s420 + $0xd8] sm:$0xff]
      %v1161 = vld [vmem:[%s420 + $0xe0] sm:$0xff]
      %v1162 = vld [vmem:[%s420 + $0xe8] sm:$0xff]
      %v1163 = vld [vmem:[%s420 + $0xf0] sm:$0xff]
      %v1164 = vld [vmem:[%s420 + $0xf8] sm:$0xff]
      %1165 = vmatprep.subr.mxu0 0.0
      %1166 = vmatpush1.msra.mxu0 %v1148
      %1167 = vmatprep.subr.mxu0 0.0
      %1168 = vmatpush1.msra.mxu0 %v1147
      %1169 = vmatprep.subr.mxu0 0.0
      %1170 = vmatpush1.msra.mxu0 %v1146
      %1171 = vmatprep.subr.mxu0 0.0
      %1172 = vmatpush1.msra.mxu0 %v1145
      %1173 = vmatprep.subr.mxu0 0.0
      %1174 = vmatpush1.msra.mxu0 %v1144
      %1175 = vmatprep.subr.mxu0 0.0
      %1176 = vmatpush1.msra.mxu0 %v1143
      %1177 = vmatprep.subr.mxu0 0.0
      %1178 = vmatpush1.msra.mxu0 %v1142
      %1179 = vmatprep.subr.mxu0 0.0
      %1180 = vmatpush1.msra.mxu0 %v1141
      %1181 = vmatprep.subr.mxu0 0.0
      %1182 = vmatpush1.msra.mxu0 %v1140
      %1183 = vmatprep.subr.mxu0 0.0
      %1184 = vmatpush1.msra.mxu0 %v1139
      %1185 = vmatprep.subr.mxu0 0.0
      %1186 = vmatpush1.msra.mxu0 %v1138
      %1187 = vmatprep.subr.mxu0 0.0
      %1188 = vmatpush1.msra.mxu0 %v1137
      %1189 = vmatprep.subr.mxu0 0.0
      %1190 = vmatpush1.msra.mxu0 %v1136
      %1191 = vmatprep.subr.mxu0 0.0
      %1192 = vmatpush1.msra.mxu0 %v1135
      %1193 = vmatprep.subr.mxu0 0.0
      %1194 = vmatpush1.msra.mxu0 %v1134
      %1195 = vmatprep.subr.mxu0 0.0
      %1196 = vmatpush1.msra.mxu0 %v1133
      %1197 = vmatprep.subr.mxu0 0.0
      %1198 = vmatpush2.msra.mxu0 %v1164
      %1199 = vmatprep.subr.mxu0 0.0
      %1200 = vmatpush2.msra.mxu0 %v1163
      %1201 = vmatprep.subr.mxu0 0.0
      %1202 = vmatpush2.msra.mxu0 %v1162
      %1203 = vmatprep.subr.mxu0 0.0
      %1204 = vmatpush2.msra.mxu0 %v1161
      %1205 = vmatprep.subr.mxu0 0.0
      %1206 = vmatpush2.msra.mxu0 %v1160
      %1207 = vmatprep.subr.mxu0 0.0
      %1208 = vmatpush2.msra.mxu0 %v1159
      %1209 = vmatprep.subr.mxu0 0.0
      %1210 = vmatpush2.msra.mxu0 %v1158
      %1211 = vmatprep.subr.mxu0 0.0
      %1212 = vmatpush2.msra.mxu0 %v1157
      %1213 = vmatprep.subr.mxu0 0.0
      %1214 = vmatpush2.msra.mxu0 %v1156
      %1215 = vmatprep.subr.mxu0 0.0
      %1216 = vmatpush2.msra.mxu0 %v1155
      %1217 = vmatprep.subr.mxu0 0.0
      %1218 = vmatpush2.msra.mxu0 %v1154
      %1219 = vmatprep.subr.mxu0 0.0
      %1220 = vmatpush2.msra.mxu0 %v1153
      %1221 = vmatprep.subr.mxu0 0.0
      %1222 = vmatpush2.msra.mxu0 %v1152
      %1223 = vmatprep.subr.mxu0 0.0
      %1224 = vmatpush2.msra.mxu0 %v1151
      %1225 = vmatprep.subr.mxu0 0.0
      %1226 = vmatpush2.msra.mxu0 %v1150
      %1227 = vmatprep.subr.mxu0 0.0
      %1228 = vmatpush2.msra.mxu0 %v1149
      %1229 = vmatprep.mubr.f32.mxu0 %v1118
      %1230 = vmatmul.mubr.f32.gmra.mxu0 %v1117
      %v1231 = vpop.f32.mrf.mxu0
      %v1232 = vadd.f32 0.0, %v1231
      %v1233 = vpop.f32.mrf.mxu0
      %1234 = vmatprep.mubr.f32.mxu0 %v1120
      %1235 = vmatmul.mubr.f32.gmra.mxu0 %v1119
      %v1236 = vpop.f32.mrf.mxu0
      %v1237 = vadd.f32 0.0, %v1236
      %v1238 = vpop.f32.mrf.mxu0
      %1239 = vmatprep.mubr.f32.mxu0 %v1122
      %1240 = vmatmul.mubr.f32.gmra.mxu0 %v1121
      %v1241 = vpop.f32.mrf.mxu0
      %v1242 = vadd.f32 0.0, %v1241
      %v1243 = vpop.f32.mrf.mxu0
      %1244 = vmatprep.mubr.f32.mxu0 %v1124
      %1245 = vmatmul.mubr.f32.gmra.mxu0 %v1123
      %v1246 = vpop.f32.mrf.mxu0
      %v1247 = vadd.f32 0.0, %v1246
      %v1248 = vpop.f32.mrf.mxu0
      %1249 = vmatprep.mubr.f32.mxu0 %v1126
      %1250 = vmatmul.mubr.f32.gmra.mxu0 %v1125
      %v1251 = vpop.f32.mrf.mxu0
      %v1252 = vadd.f32 0.0, %v1251
      %v1253 = vpop.f32.mrf.mxu0
      %1254 = vmatprep.mubr.f32.mxu0 %v1128
      %1255 = vmatmul.mubr.f32.gmra.mxu0 %v1127
      %v1256 = vpop.f32.mrf.mxu0
      %v1257 = vadd.f32 0.0, %v1256
      %v1258 = vpop.f32.mrf.mxu0
      %1259 = vmatprep.mubr.f32.mxu0 %v1130
      %1260 = vmatmul.mubr.f32.gmra.mxu0 %v1129
      %v1261 = vpop.f32.mrf.mxu0
      %v1262 = vadd.f32 0.0, %v1261
      %v1263 = vpop.f32.mrf.mxu0
      %1264 = vmatprep.mubr.f32.mxu0 %v1132
      %1265 = vmatmul.mubr.f32.gmra.mxu0 %v1131
      %v1266 = vpop.f32.mrf.mxu0
      %v1267 = vadd.f32 0.0, %v1266
      %v1268 = vpop.f32.mrf.mxu0
      %1269 = vdwg.mxu0
      %s1270 = scalar_lea.vmem %s410, %s455
      %v1271 = vld [vmem:[%s1270] sm:$0xff]
      %v1272 = vld [vmem:[%s1270 + $0x8] sm:$0xff]
      %v1273 = vld [vmem:[%s1270 + $0x10] sm:$0xff]
      %v1274 = vld [vmem:[%s1270 + $0x18] sm:$0xff]
      %v1275 = vld [vmem:[%s1270 + $0x20] sm:$0xff]
      %v1276 = vld [vmem:[%s1270 + $0x28] sm:$0xff]
      %v1277 = vld [vmem:[%s1270 + $0x30] sm:$0xff]
      %v1278 = vld [vmem:[%s1270 + $0x38] sm:$0xff]
      %s1279 = scalar_lea.vmem %s415, %s455
      %v1280 = vld [vmem:[%s1279] sm:$0xff]
      %v1281 = vld [vmem:[%s1279 + $0x8] sm:$0xff]
      %v1282 = vld [vmem:[%s1279 + $0x10] sm:$0xff]
      %v1283 = vld [vmem:[%s1279 + $0x18] sm:$0xff]
      %v1284 = vld [vmem:[%s1279 + $0x20] sm:$0xff]
      %v1285 = vld [vmem:[%s1279 + $0x28] sm:$0xff]
      %v1286 = vld [vmem:[%s1279 + $0x30] sm:$0xff]
      %v1287 = vld [vmem:[%s1279 + $0x38] sm:$0xff]
      %v1288 = vmul.f32 %v1232, %v1271
      %v1289 = vmul.f32 %v1237, %v1272
      %v1290 = vmul.f32 %v1242, %v1273
      %v1291 = vmul.f32 %v1247, %v1274
      %v1292 = vmul.f32 %v1252, %v1275
      %v1293 = vmul.f32 %v1257, %v1276
      %v1294 = vmul.f32 %v1262, %v1277
      %v1295 = vmul.f32 %v1267, %v1278
      %1304 = vrot.lane.b32.xlu0 %v1232, 96
      %v1305 = vpop.permute.xlu0 %1304
      %1306 = vrot.lane.b32.xlu0 %v1237, 96
      %v1307 = vpop.permute.xlu0 %1306
      %1308 = vrot.lane.b32.xlu0 %v1242, 96
      %v1309 = vpop.permute.xlu0 %1308
      %1310 = vrot.lane.b32.xlu0 %v1247, 96
      %v1311 = vpop.permute.xlu0 %1310
      %1312 = vrot.lane.b32.xlu0 %v1252, 96
      %v1313 = vpop.permute.xlu0 %1312
      %1314 = vrot.lane.b32.xlu0 %v1257, 96
      %v1315 = vpop.permute.xlu0 %1314
      %1316 = vrot.lane.b32.xlu0 %v1262, 96
      %v1317 = vpop.permute.xlu0 %1316
      %1318 = vrot.lane.b32.xlu0 %v1267, 96
      %v1319 = vpop.permute.xlu0 %1318
      %1328 = vrot.lane.b32.xlu0 %v1232, 32
      %v1329 = vpop.permute.xlu0 %1328
      %1330 = vrot.lane.b32.xlu0 %v1237, 32
      %v1331 = vpop.permute.xlu0 %1330
      %1332 = vrot.lane.b32.xlu0 %v1242, 32
      %v1333 = vpop.permute.xlu0 %1332
      %1334 = vrot.lane.b32.xlu0 %v1247, 32
      %v1335 = vpop.permute.xlu0 %1334
      %1336 = vrot.lane.b32.xlu0 %v1252, 32
      %v1337 = vpop.permute.xlu0 %1336
      %1338 = vrot.lane.b32.xlu0 %v1257, 32
      %v1339 = vpop.permute.xlu0 %1338
      %1340 = vrot.lane.b32.xlu0 %v1262, 32
      %v1341 = vpop.permute.xlu0 %1340
      %1342 = vrot.lane.b32.xlu0 %v1267, 32
      %v1343 = vpop.permute.xlu0 %1342
      %vm1352 = vcmask 261120
      %v1353 = vsel %vm1352, %v1305, %v1329
      %v1354 = vsel %vm1352, %v1307, %v1331
      %v1355 = vsel %vm1352, %v1309, %v1333
      %v1356 = vsel %vm1352, %v1311, %v1335
      %v1357 = vsel %vm1352, %v1313, %v1337
      %v1358 = vsel %vm1352, %v1315, %v1339
      %v1359 = vsel %vm1352, %v1317, %v1341
      %v1360 = vsel %vm1352, %v1319, %v1343
      %v1361 = vmul.f32 %v1353, %v1280
      %v1362 = vmul.f32 %v1354, %v1281
      %v1363 = vmul.f32 %v1355, %v1282
      %v1364 = vmul.f32 %v1356, %v1283
      %v1365 = vmul.f32 %v1357, %v1284
      %v1366 = vmul.f32 %v1358, %v1285
      %v1367 = vmul.f32 %v1359, %v1286
      %v1368 = vmul.f32 %v1360, %v1287
      %v1369 = vadd.f32 %v1288, %v1361
      %v1370 = vadd.f32 %v1289, %v1362
      %v1371 = vadd.f32 %v1290, %v1363
      %v1372 = vadd.f32 %v1291, %v1364
      %v1373 = vadd.f32 %v1292, %v1365
      %v1374 = vadd.f32 %v1293, %v1366
      %v1375 = vadd.f32 %v1294, %v1367
      %v1376 = vadd.f32 %v1295, %v1368
      %v1377 = vmul.f32 %v1369, 0.125
      %v1378 = vmul.f32 %v1370, 0.125
      %v1379 = vmul.f32 %v1371, 0.125
      %v1380 = vmul.f32 %v1372, 0.125
      %v1381 = vmul.f32 %v1373, 0.125
      %v1382 = vmul.f32 %v1374, 0.125
      %v1383 = vmul.f32 %v1375, 0.125
      %v1384 = vmul.f32 %v1376, 0.125
      %v1385 = vld [vmem:[#allocation2] sm:$0xff]
      %v1386 = vld [vmem:[#allocation2 + $0x8] sm:$0xff]
      %v1387 = vld [vmem:[#allocation2 + $0x10] sm:$0xff]
      %v1388 = vld [vmem:[#allocation2 + $0x18] sm:$0xff]
      %v1389 = vld [vmem:[#allocation2 + $0x20] sm:$0xff]
      %v1390 = vld [vmem:[#allocation2 + $0x28] sm:$0xff]
      %v1391 = vld [vmem:[#allocation2 + $0x30] sm:$0xff]
      %v1392 = vld [vmem:[#allocation2 + $0x38] sm:$0xff]
      %v1393 = vld [vmem:[%s439] sm:$0xff]
      %v1394 = vld [vmem:[%s439 + $0x8] sm:$0xff]
      %v1395 = vld [vmem:[%s439 + $0x10] sm:$0xff]
      %v1396 = vld [vmem:[%s439 + $0x18] sm:$0xff]
      %v1397 = vld [vmem:[%s439 + $0x20] sm:$0xff]
      %v1398 = vld [vmem:[%s439 + $0x28] sm:$0xff]
      %v1399 = vld [vmem:[%s439 + $0x30] sm:$0xff]
      %v1400 = vld [vmem:[%s439 + $0x38] sm:$0xff]
      %vm1401 = vcmask 523264
      %v1403 = vsel %vm1401, %v1377, 0
      %v1406 = vsel %vm1401, %v1378, 0
      %v1409 = vsel %vm1401, %v1379, 0
      %v1412 = vsel %vm1401, %v1380, 0
      %v1415 = vsel %vm1401, %v1381, 0
      %v1418 = vsel %vm1401, %v1382, 0
      %v1421 = vsel %vm1401, %v1383, 0
      %v1424 = vsel %vm1401, %v1384, 0
      %1426 = vmatprep.subr.mxu0 0.0
      %1427 = vmatpush1.msra.mxu0 0.0
      %1428 = vmatprep.subr.mxu0 0.0
      %1429 = vmatpush1.msra.mxu0 0.0
      %1430 = vmatprep.subr.mxu0 0.0
      %1431 = vmatpush1.msra.mxu0 0.0
      %1432 = vmatprep.subr.mxu0 0.0
      %1433 = vmatpush1.msra.mxu0 0.0
      %1434 = vmatprep.subr.mxu0 0.0
      %1435 = vmatpush1.msra.mxu0 0.0
      %1436 = vmatprep.subr.mxu0 0.0
      %1437 = vmatpush1.msra.mxu0 0.0
      %1438 = vmatprep.subr.mxu0 0.0
      %1439 = vmatpush1.msra.mxu0 0.0
      %1440 = vmatprep.subr.mxu0 0.0
      %1441 = vmatpush1.msra.mxu0 0.0
      %1442 = vmatprep.subr.mxu0 0.0
      %1443 = vmatpush1.msra.mxu0 %v1392
      %1444 = vmatprep.subr.mxu0 0.0
      %1445 = vmatpush1.msra.mxu0 %v1391
      %1446 = vmatprep.subr.mxu0 0.0
      %1447 = vmatpush1.msra.mxu0 %v1390
      %1448 = vmatprep.subr.mxu0 0.0
      %1449 = vmatpush1.msra.mxu0 %v1389
      %1450 = vmatprep.subr.mxu0 0.0
      %1451 = vmatpush1.msra.mxu0 %v1388
      %1452 = vmatprep.subr.mxu0 0.0
      %1453 = vmatpush1.msra.mxu0 %v1387
      %1454 = vmatprep.subr.mxu0 0.0
      %1455 = vmatpush1.msra.mxu0 %v1386
      %1456 = vmatprep.subr.mxu0 0.0
      %1457 = vmatpush1.msra.mxu0 %v1385
      %1458 = vmatprep.subr.mxu0 0.0
      %1459 = vmatpush2.msra.mxu0 0.0
      %1460 = vmatprep.subr.mxu0 0.0
      %1461 = vmatpush2.msra.mxu0 0.0
      %1462 = vmatprep.subr.mxu0 0.0
      %1463 = vmatpush2.msra.mxu0 0.0
      %1464 = vmatprep.subr.mxu0 0.0
      %1465 = vmatpush2.msra.mxu0 0.0
      %1466 = vmatprep.subr.mxu0 0.0
      %1467 = vmatpush2.msra.mxu0 0.0
      %1468 = vmatprep.subr.mxu0 0.0
      %1469 = vmatpush2.msra.mxu0 0.0
      %1470 = vmatprep.subr.mxu0 0.0
      %1471 = vmatpush2.msra.mxu0 0.0
      %1472 = vmatprep.subr.mxu0 0.0
      %1473 = vmatpush2.msra.mxu0 0.0
      %1474 = vmatprep.subr.mxu0 0.0
      %1475 = vmatpush2.msra.mxu0 0.0
      %1476 = vmatprep.subr.mxu0 0.0
      %1477 = vmatpush2.msra.mxu0 0.0
      %1478 = vmatprep.subr.mxu0 0.0
      %1479 = vmatpush2.msra.mxu0 0.0
      %1480 = vmatprep.subr.mxu0 0.0
      %1481 = vmatpush2.msra.mxu0 0.0
      %1482 = vmatprep.subr.mxu0 0.0
      %1483 = vmatpush2.msra.mxu0 0.0
      %1484 = vmatprep.subr.mxu0 0.0
      %1485 = vmatpush2.msra.mxu0 0.0
      %1486 = vmatprep.subr.mxu0 0.0
      %1487 = vmatpush2.msra.mxu0 0.0
      %1488 = vmatprep.subr.mxu0 0.0
      %1489 = vmatpush2.msra.mxu0 0.0
      %1490 = vmatprep.mubr.f32.mxu0 0.0
      %1491 = vmatmul.mubr.f32.gmra.mxu0 %v1403
      %v1492 = vpop.f32.mrf.mxu0
      %v1493 = vadd.f32 %v1393, %v1492
      %v1494 = vpop.f32.mrf.mxu0
      %1495 = vmatprep.mubr.f32.mxu0 0.0
      %1496 = vmatmul.mubr.f32.gmra.mxu0 %v1406
      %v1497 = vpop.f32.mrf.mxu0
      %v1498 = vadd.f32 %v1394, %v1497
      %v1499 = vpop.f32.mrf.mxu0
      %1500 = vmatprep.mubr.f32.mxu0 0.0
      %1501 = vmatmul.mubr.f32.gmra.mxu0 %v1409
      %v1502 = vpop.f32.mrf.mxu0
      %v1503 = vadd.f32 %v1395, %v1502
      %v1504 = vpop.f32.mrf.mxu0
      %1505 = vmatprep.mubr.f32.mxu0 0.0
      %1506 = vmatmul.mubr.f32.gmra.mxu0 %v1412
      %v1507 = vpop.f32.mrf.mxu0
      %v1508 = vadd.f32 %v1396, %v1507
      %v1509 = vpop.f32.mrf.mxu0
      %1510 = vmatprep.mubr.f32.mxu0 0.0
      %1511 = vmatmul.mubr.f32.gmra.mxu0 %v1415
      %v1512 = vpop.f32.mrf.mxu0
      %v1513 = vadd.f32 %v1397, %v1512
      %v1514 = vpop.f32.mrf.mxu0
      %1515 = vmatprep.mubr.f32.mxu0 0.0
      %1516 = vmatmul.mubr.f32.gmra.mxu0 %v1418
      %v1517 = vpop.f32.mrf.mxu0
      %v1518 = vadd.f32 %v1398, %v1517
      %v1519 = vpop.f32.mrf.mxu0
      %1520 = vmatprep.mubr.f32.mxu0 0.0
      %1521 = vmatmul.mubr.f32.gmra.mxu0 %v1421
      %v1522 = vpop.f32.mrf.mxu0
      %v1523 = vadd.f32 %v1399, %v1522
      %v1524 = vpop.f32.mrf.mxu0
      %1525 = vmatprep.mubr.f32.mxu0 0.0
      %1526 = vmatmul.mubr.f32.gmra.mxu0 %v1424
      %v1527 = vpop.f32.mrf.mxu0
      %v1528 = vadd.f32 %v1400, %v1527
      %v1529 = vpop.f32.mrf.mxu0
      %1530 = vdwg.mxu0
      %v1531 = vmax.f32 %v1493, -3.4028235e+38
      %v1532 = vmax.f32 %v1498, -3.4028235e+38
      %v1533 = vmax.f32 %v1503, -3.4028235e+38
      %v1534 = vmax.f32 %v1508, -3.4028235e+38
      %v1535 = vmax.f32 %v1513, -3.4028235e+38
      %v1536 = vmax.f32 %v1518, -3.4028235e+38
      %v1537 = vmax.f32 %v1523, -3.4028235e+38
      %v1538 = vmax.f32 %v1528, -3.4028235e+38
      %1539 = vmax.xlane.f32.xlu0 %v1531
      %v1540 = vpop.xlane.xlu0 %1539
      %1541 = vmax.xlane.f32.xlu0 %v1532
      %v1542 = vpop.xlane.xlu0 %1541
      %1543 = vmax.xlane.f32.xlu0 %v1533
      %v1544 = vpop.xlane.xlu0 %1543
      %1545 = vmax.xlane.f32.xlu0 %v1534
      %v1546 = vpop.xlane.xlu0 %1545
      %1547 = vmax.xlane.f32.xlu0 %v1535
      %v1548 = vpop.xlane.xlu0 %1547
      %1549 = vmax.xlane.f32.xlu0 %v1536
      %v1550 = vpop.xlane.xlu0 %1549
      %1551 = vmax.xlane.f32.xlu0 %v1537
      %v1552 = vpop.xlane.xlu0 %1551
      %1553 = vmax.xlane.f32.xlu0 %v1538
      %v1554 = vpop.xlane.xlu0 %1553
      %v1555 = vsub.f32 %v1531, %v1540
      %v1556 = vsub.f32 %v1532, %v1542
      %v1557 = vsub.f32 %v1533, %v1544
      %v1558 = vsub.f32 %v1534, %v1546
      %v1559 = vsub.f32 %v1535, %v1548
      %v1560 = vsub.f32 %v1536, %v1550
      %v1561 = vsub.f32 %v1537, %v1552
      %v1562 = vsub.f32 %v1538, %v1554
      %v1563 = vmul.f32 %v1555, 1.442695
      %v1564 = vpow.pop %v1563
      %v1565 = vmul.f32 %v1556, 1.442695
      %v1566 = vpow.pop %v1565
      %v1567 = vmul.f32 %v1557, 1.442695
      %v1568 = vpow.pop %v1567
      %v1569 = vmul.f32 %v1558, 1.442695
      %v1570 = vpow.pop %v1569
      %v1571 = vmul.f32 %v1559, 1.442695
      %v1572 = vpow.pop %v1571
      %v1573 = vmul.f32 %v1560, 1.442695
      %v1574 = vpow.pop %v1573
      %v1575 = vmul.f32 %v1561, 1.442695
      %v1576 = vpow.pop %v1575
      %v1577 = vmul.f32 %v1562, 1.442695
      %v1578 = vpow.pop %v1577
      %1579 = vadd.xlane.f32.xlu0 %v1564
      %v1580 = vpop.xlane.xlu0 %1579
      %1581 = vadd.xlane.f32.xlu0 %v1566
      %v1582 = vpop.xlane.xlu0 %1581
      %1583 = vadd.xlane.f32.xlu0 %v1568
      %v1584 = vpop.xlane.xlu0 %1583
      %1585 = vadd.xlane.f32.xlu0 %v1570
      %v1586 = vpop.xlane.xlu0 %1585
      %1587 = vadd.xlane.f32.xlu0 %v1572
      %v1588 = vpop.xlane.xlu0 %1587
      %1589 = vadd.xlane.f32.xlu0 %v1574
      %v1590 = vpop.xlane.xlu0 %1589
      %1591 = vadd.xlane.f32.xlu0 %v1576
      %v1592 = vpop.xlane.xlu0 %1591
      %1593 = vadd.xlane.f32.xlu0 %v1578
      %v1594 = vpop.xlane.xlu0 %1593
      %v1595 = vrcp.pop %v1580
      %v1596 = vmul.f32 %v1564, %v1595
      %v1597 = vrcp.pop %v1582
      %v1598 = vmul.f32 %v1566, %v1597
      %v1599 = vrcp.pop %v1584
      %v1600 = vmul.f32 %v1568, %v1599
      %v1601 = vrcp.pop %v1586
      %v1602 = vmul.f32 %v1570, %v1601
      %v1603 = vrcp.pop %v1588
      %v1604 = vmul.f32 %v1572, %v1603
      %v1605 = vrcp.pop %v1590
      %v1606 = vmul.f32 %v1574, %v1605
      %v1607 = vrcp.pop %v1592
      %v1608 = vmul.f32 %v1576, %v1607
      %v1609 = vrcp.pop %v1594
      %v1610 = vmul.f32 %v1578, %v1609
      %v1611 = vld [vmem:[#allocation3] sm:$0xff]
      %v1612 = vld [vmem:[#allocation3 + $0x8] sm:$0xff]
      %v1613 = vld [vmem:[#allocation3 + $0x10] sm:$0xff]
      %v1614 = vld [vmem:[#allocation3 + $0x18] sm:$0xff]
      %v1615 = vld [vmem:[#allocation3 + $0x20] sm:$0xff]
      %v1616 = vld [vmem:[#allocation3 + $0x28] sm:$0xff]
      %v1617 = vld [vmem:[#allocation3 + $0x30] sm:$0xff]
      %v1618 = vld [vmem:[#allocation3 + $0x38] sm:$0xff]
      %v1619 = vld [vmem:[#allocation3 + $0x40] sm:$0xff]
      %v1620 = vld [vmem:[#allocation3 + $0x48] sm:$0xff]
      %v1621 = vld [vmem:[#allocation3 + $0x50] sm:$0xff]
      %v1622 = vld [vmem:[#allocation3 + $0x58] sm:$0xff]
      %v1623 = vld [vmem:[#allocation3 + $0x60] sm:$0xff]
      %v1624 = vld [vmem:[#allocation3 + $0x68] sm:$0xff]
      %v1625 = vld [vmem:[#allocation3 + $0x70] sm:$0xff]
      %v1626 = vld [vmem:[#allocation3 + $0x78] sm:$0xff]
      %1627 = vmatprep.subr.mxu0 0.0
      %1628 = vmatpush1.msra.mxu0 %v1626
      %1629 = vmatprep.subr.mxu0 0.0
      %1630 = vmatpush1.msra.mxu0 %v1625
      %1631 = vmatprep.subr.mxu0 0.0
      %1632 = vmatpush1.msra.mxu0 %v1624
      %1633 = vmatprep.subr.mxu0 0.0
      %1634 = vmatpush1.msra.mxu0 %v1623
      %1635 = vmatprep.subr.mxu0 0.0
      %1636 = vmatpush1.msra.mxu0 %v1622
      %1637 = vmatprep.subr.mxu0 0.0
      %1638 = vmatpush1.msra.mxu0 %v1621
      %1639 = vmatprep.subr.mxu0 0.0
      %1640 = vmatpush1.msra.mxu0 %v1620
      %1641 = vmatprep.subr.mxu0 0.0
      %1642 = vmatpush1.msra.mxu0 %v1619
      %1643 = vmatprep.subr.mxu0 0.0
      %1644 = vmatpush1.msra.mxu0 %v1618
      %1645 = vmatprep.subr.mxu0 0.0
      %1646 = vmatpush1.msra.mxu0 %v1617
      %1647 = vmatprep.subr.mxu0 0.0
      %1648 = vmatpush1.msra.mxu0 %v1616
      %1649 = vmatprep.subr.mxu0 0.0
      %1650 = vmatpush1.msra.mxu0 %v1615
      %1651 = vmatprep.subr.mxu0 0.0
      %1652 = vmatpush1.msra.mxu0 %v1614
      %1653 = vmatprep.subr.mxu0 0.0
      %1654 = vmatpush1.msra.mxu0 %v1613
      %1655 = vmatprep.subr.mxu0 0.0
      %1656 = vmatpush1.msra.mxu0 %v1612
      %1657 = vmatprep.subr.mxu0 0.0
      %1658 = vmatpush1.msra.mxu0 %v1611
      %1659 = vmatprep.subr.mxu0 0.0
      %1660 = vmatpush2.msra.mxu0 0.0
      %1661 = vmatprep.subr.mxu0 0.0
      %1662 = vmatpush2.msra.mxu0 0.0
      %1663 = vmatprep.subr.mxu0 0.0
      %1664 = vmatpush2.msra.mxu0 0.0
      %1665 = vmatprep.subr.mxu0 0.0
      %1666 = vmatpush2.msra.mxu0 0.0
      %1667 = vmatprep.subr.mxu0 0.0
      %1668 = vmatpush2.msra.mxu0 0.0
      %1669 = vmatprep.subr.mxu0 0.0
      %1670 = vmatpush2.msra.mxu0 0.0
      %1671 = vmatprep.subr.mxu0 0.0
      %1672 = vmatpush2.msra.mxu0 0.0
      %1673 = vmatprep.subr.mxu0 0.0
      %1674 = vmatpush2.msra.mxu0 0.0
      %1675 = vmatprep.subr.mxu0 0.0
      %1676 = vmatpush2.msra.mxu0 0.0
      %1677 = vmatprep.subr.mxu0 0.0
      %1678 = vmatpush2.msra.mxu0 0.0
      %1679 = vmatprep.subr.mxu0 0.0
      %1680 = vmatpush2.msra.mxu0 0.0
      %1681 = vmatprep.subr.mxu0 0.0
      %1682 = vmatpush2.msra.mxu0 0.0
      %1683 = vmatprep.subr.mxu0 0.0
      %1684 = vmatpush2.msra.mxu0 0.0
      %1685 = vmatprep.subr.mxu0 0.0
      %1686 = vmatpush2.msra.mxu0 0.0
      %1687 = vmatprep.subr.mxu0 0.0
      %1688 = vmatpush2.msra.mxu0 0.0
      %1689 = vmatprep.subr.mxu0 0.0
      %1690 = vmatpush2.msra.mxu0 0.0
      %1691 = vmatprep.mubr.f32.mxu0 0.0
      %1692 = vmatmul.mubr.f32.gmra.mxu0 %v1596
      %v1693 = vpop.f32.mrf.mxu0
      %v1694 = vadd.f32 0.0, %v1693
      %v1695 = vpop.f32.mrf.mxu0
      %1696 = vmatprep.mubr.f32.mxu0 0.0
      %1697 = vmatmul.mubr.f32.gmra.mxu0 %v1598
      %v1698 = vpop.f32.mrf.mxu0
      %v1699 = vadd.f32 0.0, %v1698
      %v1700 = vpop.f32.mrf.mxu0
      %1701 = vmatprep.mubr.f32.mxu0 0.0
      %1702 = vmatmul.mubr.f32.gmra.mxu0 %v1600
      %v1703 = vpop.f32.mrf.mxu0
      %v1704 = vadd.f32 0.0, %v1703
      %v1705 = vpop.f32.mrf.mxu0
      %1706 = vmatprep.mubr.f32.mxu0 0.0
      %1707 = vmatmul.mubr.f32.gmra.mxu0 %v1602
      %v1708 = vpop.f32.mrf.mxu0
      %v1709 = vadd.f32 0.0, %v1708
      %v1710 = vpop.f32.mrf.mxu0
      %1711 = vmatprep.mubr.f32.mxu0 0.0
      %1712 = vmatmul.mubr.f32.gmra.mxu0 %v1604
      %v1713 = vpop.f32.mrf.mxu0
      %v1714 = vadd.f32 0.0, %v1713
      %v1715 = vpop.f32.mrf.mxu0
      %1716 = vmatprep.mubr.f32.mxu0 0.0
      %1717 = vmatmul.mubr.f32.gmra.mxu0 %v1606
      %v1718 = vpop.f32.mrf.mxu0
      %v1719 = vadd.f32 0.0, %v1718
      %v1720 = vpop.f32.mrf.mxu0
      %1721 = vmatprep.mubr.f32.mxu0 0.0
      %1722 = vmatmul.mubr.f32.gmra.mxu0 %v1608
      %v1723 = vpop.f32.mrf.mxu0
      %v1724 = vadd.f32 0.0, %v1723
      %v1725 = vpop.f32.mrf.mxu0
      %1726 = vmatprep.mubr.f32.mxu0 0.0
      %1727 = vmatmul.mubr.f32.gmra.mxu0 %v1610
      %v1728 = vpop.f32.mrf.mxu0
      %v1729 = vadd.f32 0.0, %v1728
      %v1730 = vpop.f32.mrf.mxu0
      %1731 = vdwg.mxu0
      %1732 = vst.msk [vmem:[%s453] sm:$0xff] %vm1401, %v1694
      %1733 = vst.msk [vmem:[%s453 + $0x8] sm:$0xff] %vm1401, %v1699
      %1734 = vst.msk [vmem:[%s453 + $0x10] sm:$0xff] %vm1401, %v1704
      %1735 = vst.msk [vmem:[%s453 + $0x18] sm:$0xff] %vm1401, %v1709
      %1736 = vst.msk [vmem:[%s453 + $0x20] sm:$0xff] %vm1401, %v1714
      %1737 = vst.msk [vmem:[%s453 + $0x28] sm:$0xff] %vm1401, %v1719
      %1738 = vst.msk [vmem:[%s453 + $0x30] sm:$0xff] %vm1401, %v1724
      %1739 = vst.msk [vmem:[%s453 + $0x38] sm:$0xff] %vm1401, %v1729
      %s1740 = smul.u32 8, %s25
      %p1741 = scmp.lt.s32.totalorder %s23, 1
      %s1742 = scalar_select %p1741, %s23, 1
      %p1743 = scmp.lt.s32.totalorder %s24, 3
      %s1744 = scalar_select %p1743, %s24, 3
      %p1745 = scmp.lt.s32.totalorder %s1740, 15
      %s1746 = scalar_select %p1745, %s1740, 15
      %s1747 = smul.addr %s1744, 16
      %s1748 = sadd.s32 %s1746, %s1747
      %s1749 = smul.addr %s1742, 64
      %s1750 = sadd.s32 %s1748, %s1749
      %s1751 = smul.addr %s1750, 8
      %s1752 = scalar_lea.vmem %s7, %s1751
      // Predicated region
      $region53: #{tpu_custom_call.1} parent=47 // pred_check
        %p1753 = pneg %p243
      $region54: #{tpu_custom_call.1} parent=47 // pred_check_branch
        %1755 = sbr.rel (%p1753) target = $region56
      $region55: #{tpu_custom_call.1} parent=47 // pred_region
        %s1756 = smul.u32 8, %s25
      $region56: #{tpu_custom_call.1} parent=47 // pred_fallthru
        _
    $region48: #{tpu_custom_call.1} parent=5 // pred_fallthru
      _
    %p1757 = scmp.le.s32.totalorder 2, %s13
    // Predicated region
    $region57: #{tpu_custom_call.1} parent=5 // pred_check
      %p1758 = pneg %p1757
    $region58: #{tpu_custom_call.1} parent=5 // pred_check_branch
      %1760 = sbr.rel (%p1758) target = $region60
    $region59: #{tpu_custom_call.1} parent=5 // pred_region
      %s1761 = ssub.s32 %s13, 2
      // Predicated region
      $region61: #{tpu_custom_call.1} parent=59 // pred_check
        %p1762 = pneg %p249
      $region62: #{tpu_custom_call.1} parent=59 // pred_check_branch
        %1764 = sbr.rel (%p1762) target = $region64
      $region63: #{tpu_custom_call.1} parent=59 // pred_region
        %s1765 = smul.u32 8, %s28
        %p1766 = scmp.lt.s32.totalorder %s26, 1
        %s1767 = scalar_select %p1766, %s26, 1
        %p1768 = scmp.lt.s32.totalorder %s27, 3
        %s1769 = scalar_select %p1768, %s27, 3
        %p1770 = scmp.lt.s32.totalorder %s1765, 15
        %s1771 = scalar_select %p1770, %s1765, 15
        %s1772 = smul.addr %s1769, 16
        %s1773 = sadd.s32 %s1771, %s1772
        %s1774 = smul.addr %s1767, 64
        %s1775 = sadd.s32 %s1773, %s1774
        %s1776 = smul.addr %s1775, 8
        %s1777 = scalar_lea.vmem %s7, %s1776
      $region64: #{tpu_custom_call.1} parent=59 // pred_fallthru
        _
    $region60: #{tpu_custom_call.1} parent=5 // pred_fallthru
      _
  $region6: #{tpu_custom_call.1} parent=0 // loop_footer
    %s17 = sadd.s32 1, %s13
  $region7: #{tpu_custom_call.1} parent=0 // loop_footer_branch
    %12 = sbr.rel target = $region3
  $region8: #{tpu_custom_call.1} parent=0 // loop_exit
    _

</llo_original>
